<compile_context>
chip_gen: v7x
topology: tpu7x:2x2x1
jax: 0.10.0
libtpu: 0.0.40
codegen_flags: <defaults>
</compile_context>

<pallas_src>
import math

import jax
import jax.numpy as jnp
from jax.experimental import pallas as pl
from jax.experimental.pallas import tpu as pltpu

LANE = 128          # TPU vreg lane width (last-dim tiling unit)
SUBLANE = 16        # row-tile granularity safe for both f32 (8) and bf16 (16) inputs
NEG_INF = -1e30


def bias_head_kernel(x_ref, w1_ref, b1_ref, w2_ref, b2_ref, logits_ref, prob_ref):
    # x: [TB, D_in] f32/bf16; w1: [D_in, Hp] bf16; b1: [1, Hp] f32
    # w2: [Hp, Cp] bf16;      b2: [1, Cp] f32 (padded class lanes = -1e30)
    #
    # Cast x to bf16 in-kernel (VPU, free under the memory bound) -> no separate
    # wrapper-side cast/materialization pass over x.
    # TODO(synk): on v7x an fp8(e4m3) x/w1 operand path would halve this DMA again;
    # kept bf16 here for cross-generation accuracy/portability.
    x = x_ref[...].astype(jnp.bfloat16)

    # bias_project: Linear(D_in -> H) + ReLU   (MXU in bf16, f32 accumulate)
    h = jnp.dot(x, w1_ref[...], preferred_element_type=jnp.float32) + b1_ref[...]
    h = jnp.maximum(h, 0.0)

    # TODO(synk): nn.Dropout(p=0.5) is stochastic in training mode; applied here as
    # the eval-mode identity (exact module.eval() forward semantics).

    # bias_predict: Linear(H -> C). Padded class lanes get logits == -1e30 via b2,
    # so exp() of them is exactly 0 and they never perturb the softmax.
    logits = jnp.dot(h.astype(jnp.bfloat16), w2_ref[...],
                     preferred_element_type=jnp.float32) + b2_ref[...]
    logits_ref[...] = logits

    # Exact softmax over the class (last) axis, all in f32.
    m = jnp.max(logits, axis=-1, keepdims=True)
    e = jnp.exp(logits - m)
    denom = jnp.sum(e, axis=-1, keepdims=True)
    prob_ref[...] = e / denom


def _round_up(n, m):
    return (n + m - 1) // m * m


def prepare_bias_head_params(w1, b1, w2, b2):
    """One-time (per weight set) pad + bf16 cast of the bias-head weights.

    Hoisted out of the per-forward path: forwards no longer pay an XLA pad/cast
    pass over w1 each call. Weights are [in_features, out_features].
    """
    d_in, h = w1.shape
    c = w2.shape[1]
    hp = _round_up(h, LANE)     # keep Hp=128: kernel is nowhere near MXU-bound
    cp = _round_up(c, LANE)
    w1p = jnp.zeros((d_in, hp), jnp.bfloat16).at[:, :h].set(w1.astype(jnp.bfloat16))
    b1p = jnp.zeros((1, hp), jnp.float32).at[:, :h].set(
        b1.reshape(1, h).astype(jnp.float32))
    w2p = jnp.zeros((hp, cp), jnp.bfloat16).at[:h, :c].set(w2.astype(jnp.bfloat16))
    b2p = jnp.full((1, cp), NEG_INF, jnp.float32).at[:, :c].set(
        b2.reshape(1, c).astype(jnp.float32))
    return {"w1": w1p, "b1": b1p, "w2": w2p, "b2": b2p, "num_classes": int(c)}


def _choose_batch_tile(batch, max_tb):
    # Prefer >= 2 grid steps so dimension_semantics=("parallel",) can shard the
    # batch across v7x's two TensorCores; never exceed max_tb rows per step.
    if batch <= 2 * max_tb:
        tb = _round_up(max(pl.cdiv(batch, 2), 1), SUBLANE)
    else:
        tb = max_tb
    return int(max(SUBLANE, min(tb, max_tb)))


def bias_model_forward(x, params, *, max_tb=1024):
    """x: [B, D_in] (f32 or bf16, unpadded); params from prepare_bias_head_params."""
    w1p, b1p, w2p, b2p = params["w1"], params["b1"], params["w2"], params["b2"]
    num_classes = params["num_classes"]
    batch, d_in = x.shape
    hp = w1p.shape[1]
    cp = w2p.shape[1]

    tb = _choose_batch_tile(batch, max_tb)
    # Ragged last tile handled by Pallas partial-block masking: padded rows only
    # influence their own (masked-out) output rows, never the valid ones.
    grid = (pl.cdiv(batch, tb),)

    # NOTE: resident weight specs use constant index_maps so they are fetched once;
    # single-buffering them (pipeline_mode=pl.Buffered(1)) would shave ~1 MiB more
    # VMEM but is unnecessary at this tile size.
    logits_p, prob_p = pl.pallas_call(
        bias_head_kernel,
        out_shape=(
            jax.ShapeDtypeStruct((batch, cp), jnp.float32),
            jax.ShapeDtypeStruct((batch, cp), jnp.float32),
        ),
        grid_spec=pltpu.PrefetchScalarGridSpec(
            num_scalar_prefetch=0,
            grid=grid,
            in_specs=[
                pl.BlockSpec((tb, d_in), lambda i: (i, 0)),   # x tile, pipelined
                pl.BlockSpec((d_in, hp), lambda i: (0, 0)),   # w1 resident
                pl.BlockSpec((1, hp), lambda i: (0, 0)),      # b1 resident
                pl.BlockSpec((hp, cp), lambda i: (0, 0)),     # w2 resident
                pl.BlockSpec((1, cp), lambda i: (0, 0)),      # b2 resident
            ],
            out_specs=(
                pl.BlockSpec((tb, cp), lambda i: (i, 0)),     # lane-dense logits
                pl.BlockSpec((tb, cp), lambda i: (i, 0)),     # lane-dense probs
            ),
        ),
        compiler_params=pltpu.CompilerParams(
            dimension_semantics=("parallel",),   # shard batch steps across TCs (v7x)
            vmem_limit_bytes=32 << 20,           # TB=1024 f32-x fits; covers v5e's
                                                 # small 16 MiB scoped default
        ),
    )(x, w1p, b1p, w2p, b2p)

    # Slice padded class lanes off in the wrapper (real lanes are exact).
    return logits_p[:, :num_classes], prob_p[:, :num_classes]


def init_params(key, bert_dim, bias_word_num, bias_middle_dim):
    """Deterministic init mimicking nn.Linear default (uniform +/- 1/sqrt(fan_in)).

    Weights are stored as [in_features, out_features] (transposed vs PyTorch).
    """
    d_in = bert_dim * bias_word_num
    k1, k2, k3, k4 = jax.random.split(key, 4)
    bound1 = 1.0 / math.sqrt(d_in)
    bound2 = 1.0 / math.sqrt(bias_middle_dim)
    w1 = jax.random.uniform(k1, (d_in, bias_middle_dim), jnp.float32, -bound1, bound1)
    b1 = jax.random.uniform(k2, (bias_middle_dim,), jnp.float32, -bound1, bound1)
    w2 = jax.random.uniform(k3, (bias_middle_dim, bias_word_num), jnp.float32,
                            -bound2, bound2)
    b2 = jax.random.uniform(k4, (bias_word_num,), jnp.float32, -bound2, bound2)
    return w1, b1, w2, b2


if __name__ == "__main__":
    bias_word_num = 3
    bias_middle_dim = 100
    bert_dim = 768
    batch = 4

    key = jax.random.PRNGKey(0)
    kx, kp = jax.random.split(key)
    x = jax.random.normal(kx, (batch, bert_dim * bias_word_num), jnp.float32)
    w1, b1, w2, b2 = init_params(kp, bert_dim, bias_word_num, bias_middle_dim)

    params = prepare_bias_head_params(w1, b1, w2, b2)   # one-time weight prep
    logits, prob = bias_model_forward(x, params)
    jax.block_until_ready((logits, prob))

    # Pure-JAX f32 reference (kernel uses bf16 matmul operands -> loose tolerance).
    ref_h = jnp.maximum(x @ w1 + b1[None, :], 0.0)
    ref_logits = ref_h @ w2 + b2[None, :]
    ref_prob = jax.nn.softmax(ref_logits, axis=1)

    assert logits.shape == (batch, bias_word_num)
    assert prob.shape == (batch, bias_word_num)
    assert bool(jnp.allclose(jnp.sum(prob, axis=1), 1.0, atol=1e-3))
    assert bool(jnp.allclose(logits, ref_logits, atol=5e-2, rtol=5e-2))
    assert bool(jnp.allclose(prob, ref_prob, atol=3e-2))

    print("KERNEL_OK")
</pallas_src>

<mosaic_0001>
module attributes {stable_mosaic.version = 11 : i64} {
  func.func @bias_head_kernel(%arg0: i32, %arg1: memref<16x2304xf32, #tpu.memory_space<vmem>>, %arg2: memref<2304x128xbf16, #tpu.memory_space<vmem>>, %arg3: memref<1x128xf32, #tpu.memory_space<vmem>>, %arg4: memref<128x128xbf16, #tpu.memory_space<vmem>>, %arg5: memref<1x128xf32, #tpu.memory_space<vmem>>, %arg6: memref<16x128xf32, #tpu.memory_space<vmem>>, %arg7: memref<16x128xf32, #tpu.memory_space<vmem>>) attributes {dimension_semantics = [#tpu.dimension_semantics<parallel>], iteration_bounds = array<i64: 1>, scalar_prefetch = 0 : i64, scratch_operands = 0 : i64, tpu.core_type = #tpu.core_type<tc>, window_params = [{transform_indices = @transform_0, window_bounds = array<i64: 16, 2304>}, {pipeline_mode = #tpu.pipeline_mode<synchronous>, transform_indices = @transform_1, window_bounds = array<i64: 2304, 128>}, {pipeline_mode = #tpu.pipeline_mode<synchronous>, transform_indices = @transform_2, window_bounds = array<i64: 1, 128>}, {pipeline_mode = #tpu.pipeline_mode<synchronous>, transform_indices = @transform_3, window_bounds = array<i64: 128, 128>}, {pipeline_mode = #tpu.pipeline_mode<synchronous>, transform_indices = @transform_4, window_bounds = array<i64: 1, 128>}, {transform_indices = @transform_5, window_bounds = array<i64: 16, 128>}, {transform_indices = @transform_6, window_bounds = array<i64: 16, 128>}]} {
    %c0 = arith.constant 0 : index
    %c0_0 = arith.constant 0 : index
    %0 = vector.load %arg1[%c0, %c0_0] : memref<16x2304xf32, #tpu.memory_space<vmem>>, vector<16x2304xf32>
    %1 = arith.truncf %0 : vector<16x2304xf32> to vector<16x2304xbf16>
    %c0_1 = arith.constant 0 : index
    %c0_2 = arith.constant 0 : index
    %2 = vector.load %arg2[%c0_1, %c0_2] : memref<2304x128xbf16, #tpu.memory_space<vmem>>, vector<2304x128xbf16>
    %cst = arith.constant dense<0.000000e+00> : vector<16x128xf32>
    %3 = tpu.matmul %1, %2, %cst {dimension_numbers = #tpu.dot_dimension_numbers<[1], [0], [0], [1], [0, 0, 1, 1], [], []>} : vector<16x2304xbf16>, vector<2304x128xbf16>, vector<16x128xf32> -> vector<16x128xf32>
    %c0_3 = arith.constant 0 : index
    %c0_4 = arith.constant 0 : index
    %4 = vector.load %arg3[%c0_3, %c0_4] : memref<1x128xf32, #tpu.memory_space<vmem>>, vector<1x128xf32>
    %5 = vector.broadcast %4 : vector<1x128xf32> to vector<16x128xf32>
    %6 = arith.addf %3, %5 : vector<16x128xf32>
    %cst_5 = arith.constant 0.000000e+00 : f32
    %7 = vector.broadcast %cst_5 : f32 to vector<16x128xf32>
    %8 = arith.maximumf %6, %7 : vector<16x128xf32>
    %9 = arith.truncf %8 : vector<16x128xf32> to vector<16x128xbf16>
    %c0_6 = arith.constant 0 : index
    %c0_7 = arith.constant 0 : index
    %10 = vector.load %arg4[%c0_6, %c0_7] : memref<128x128xbf16, #tpu.memory_space<vmem>>, vector<128x128xbf16>
    %cst_8 = arith.constant dense<0.000000e+00> : vector<16x128xf32>
    %11 = tpu.matmul %9, %10, %cst_8 {dimension_numbers = #tpu.dot_dimension_numbers<[1], [0], [0], [1], [0, 0, 1, 1], [], []>} : vector<16x128xbf16>, vector<128x128xbf16>, vector<16x128xf32> -> vector<16x128xf32>
    %c0_9 = arith.constant 0 : index
    %c0_10 = arith.constant 0 : index
    %12 = vector.load %arg5[%c0_9, %c0_10] : memref<1x128xf32, #tpu.memory_space<vmem>>, vector<1x128xf32>
    %13 = vector.broadcast %12 : vector<1x128xf32> to vector<16x128xf32>
    %14 = arith.addf %11, %13 : vector<16x128xf32>
    %c0_11 = arith.constant 0 : index
    %c0_12 = arith.constant 0 : index
    %15 = vector.load %arg6[%c0_11, %c0_12] : memref<16x128xf32, #tpu.memory_space<vmem>>, vector<16x128xf32>
    tpu.vector_store %arg6[%c0_11, %c0_12], %14 {strides = array<i32>} : memref<16x128xf32, #tpu.memory_space<vmem>>, vector<16x128xf32>,
    %cst_13 = arith.constant dense<0xFF800000> : vector<16xf32>
    %16 = vector.multi_reduction <maximumf>, %14, %cst_13 [1] : vector<16x128xf32> to vector<16xf32>
    %17 = vector.shape_cast %16 : vector<16xf32> to vector<16x1xf32>
    %18 = vector.broadcast %17 : vector<16x1xf32> to vector<16x128xf32>
    %19 = arith.subf %14, %18 : vector<16x128xf32>
    %20 = math.exp %19 : vector<16x128xf32>
    %cst_14 = arith.constant dense<0.000000e+00> : vector<16xf32>
    %21 = vector.multi_reduction <add>, %20, %cst_14 [1] : vector<16x128xf32> to vector<16xf32>
    %22 = vector.shape_cast %21 : vector<16xf32> to vector<16x1xf32>
    %23 = vector.broadcast %22 : vector<16x1xf32> to vector<16x128xf32>
    %24 = arith.divf %20, %23 : vector<16x128xf32>
    %c0_15 = arith.constant 0 : index
    %c0_16 = arith.constant 0 : index
    %25 = vector.load %arg7[%c0_15, %c0_16] : memref<16x128xf32, #tpu.memory_space<vmem>>, vector<16x128xf32>
    tpu.vector_store %arg7[%c0_15, %c0_16], %24 {strides = array<i32>} : memref<16x128xf32, #tpu.memory_space<vmem>>, vector<16x128xf32>,
    return
  }
  func.func @transform_0(%arg0: i32) -> (i32, i32) {
    %c0_i32 = arith.constant 0 : i32
    %c0_i32_0 = arith.constant 0 : i32
    return %arg0, %c0_i32 : i32, i32
  }
  func.func @transform_1(%arg0: i32) -> (i32, i32) {
    %c0_i32 = arith.constant 0 : i32
    %c0_i32_0 = arith.constant 0 : i32
    %c0_i32_1 = arith.constant 0 : i32
    return %c0_i32, %c0_i32_0 : i32, i32
  }
  func.func @transform_2(%arg0: i32) -> (i32, i32) {
    %c0_i32 = arith.constant 0 : i32
    %c0_i32_0 = arith.constant 0 : i32
    %c0_i32_1 = arith.constant 0 : i32
    return %c0_i32, %c0_i32_0 : i32, i32
  }
  func.func @transform_3(%arg0: i32) -> (i32, i32) {
    %c0_i32 = arith.constant 0 : i32
    %c0_i32_0 = arith.constant 0 : i32
    %c0_i32_1 = arith.constant 0 : i32
    return %c0_i32, %c0_i32_0 : i32, i32
  }
  func.func @transform_4(%arg0: i32) -> (i32, i32) {
    %c0_i32 = arith.constant 0 : i32
    %c0_i32_0 = arith.constant 0 : i32
    %c0_i32_1 = arith.constant 0 : i32
    return %c0_i32, %c0_i32_0 : i32, i32
  }
  func.func @transform_5(%arg0: i32) -> (i32, i32) {
    %c0_i32 = arith.constant 0 : i32
    %c0_i32_0 = arith.constant 0 : i32
    return %arg0, %c0_i32 : i32, i32
  }
  func.func @transform_6(%arg0: i32) -> (i32, i32) {
    %c0_i32 = arith.constant 0 : i32
    %c0_i32_0 = arith.constant 0 : i32
    return %arg0, %c0_i32 : i32, i32
  }
}

</mosaic_0001>

<llo_original>
// kernel: tpu_custom_call.1
$region0: #{tpu_custom_call.1}
  #allocation0 [shape = 'u32[]', space=smem, size = 0x4, offset = 0x4, fixed_abs, tag = 'smem constant byte address 0x4 - core index']
  #allocation1 [shape = 'u32[144,128]{1,0:T(1,128)}', space=vmem, size = 0x12000, scoped, tag = 'internal scratch']
  %s0 = inlined_call_operand.hbm [shape: f32[4,2304], index: 0, kind: input, shape index: {}]
  %s1 = inlined_call_operand.hbm [shape: bf16[2304,128], index: 1, kind: input, shape index: {}]
  %s2 = inlined_call_operand.vmem [shape: f32[1,128], index: 2, kind: input, shape index: {}]
  %s3 = inlined_call_operand.hbm [shape: bf16[128,128], index: 3, kind: input, shape index: {}]
  %s4 = inlined_call_operand.vmem [shape: f32[1,128], index: 4, kind: input, shape index: {}]
  %s5 = inlined_call_operand.hbm [shape: f32[4,128], index: 5, kind: output, shape index: {0}]
  %s6 = inlined_call_operand.hbm [shape: f32[4,128], index: 6, kind: output, shape index: {1}]
  %7 = xla_tuple %s5, %s6
  %s8 = sld [smem:[#allocation0]]
  $region50: #{tpu_custom_call.1} parent=0
    _
  %s10 = ssub.s32 1, %s8
  %s11 = scalar_select 0, %s10, %s8
  $region1: #{tpu_custom_call.1} parent=0
    #allocation2 [shape = 'u8[147456]{0}', space=vmem, size = 0x24000, scoped, tag = 'input window, operand 0, single buffered']
    #allocation3 [shape = 's32[1]{0}', space=sflag, size = 0x4, scoped, tag = 'scoped memory for tpu_custom_call.1']
    #allocation4 [shape = 's32[1]{0}', space=sflag, size = 0x4, scoped, tag = 'scoped memory for tpu_custom_call.1']
    #allocation5 [shape = 'u8[589824]{0}', space=vmem, size = 0x90000, scoped, tag = 'input window, operand 1, single buffered']
    #allocation6 [shape = 's32[1]{0}', space=sflag, size = 0x4, scoped, tag = 'scoped memory for tpu_custom_call.1']
    #allocation7 [shape = 'u8[32768]{0}', space=vmem, size = 0x8000, scoped, tag = 'input window, operand 3, single buffered']
    #allocation8 [shape = 'u8[8192]{0}', space=vmem, size = 0x2000, scoped, tag = 'output window, operand 0, single buffered']
    #allocation9 [shape = 'u8[8192]{0}', space=vmem, size = 0x2000, scoped, tag = 'output window, operand 1, single buffered']
    #allocation10 [shape = 's32[1]{0}', space=sflag, size = 0x4, scoped, tag = 'scoped memory for tpu_custom_call.1']
    %12 = vsyncpa [#allocation3], 0
    %13 = vsyncpa [#allocation6], 0
    %14 = vsyncpa [#allocation4], 0
    %15 = vsyncpa [#allocation10], 0
    // Predicated region
    $region2: #{tpu_custom_call.1} parent=1 // pred_check
      _
    $region3: #{tpu_custom_call.1} parent=1 // pred_check_branch
      %17 = sbr.rel (0) target = $region5
    $region4: #{tpu_custom_call.1} parent=1 // pred_region
      %s19 = ssub.s32 4608, 1152
      %20 = vsyncadd [#allocation3], %s19
      %s21 = sshll.u32 [#allocation2], 4
      %s22 = int_to_ptr.vmem [resolvable:$true] %s21
      %27 = dma.hbm_to_vmem [thread:$0]  %s0, 1152, %s22, [#allocation3], 1152, 1152, 72
    $region5: #{tpu_custom_call.1} parent=1 // pred_fallthru
      _
    // Predicated region
    $region6: #{tpu_custom_call.1} parent=1 // pred_check
      _
    $region7: #{tpu_custom_call.1} parent=1 // pred_check_branch
      %29 = sbr.rel (0) target = $region9
    $region8: #{tpu_custom_call.1} parent=1 // pred_region
      %s31 = ssub.s32 18432, 18432
      %32 = vsyncadd [#allocation6], %s31
      %s33 = sshll.u32 [#allocation5], 4
      %s34 = int_to_ptr.vmem [resolvable:$true] %s33
      %39 = dma.hbm_to_vmem [thread:$0]  %s1, 18432, %s34, [#allocation6], 64, 64, 4
    $region9: #{tpu_custom_call.1} parent=1 // pred_fallthru
      _
    // Predicated region
    $region10: #{tpu_custom_call.1} parent=1 // pred_check
      _
    $region11: #{tpu_custom_call.1} parent=1 // pred_check_branch
      %41 = sbr.rel (0) target = $region13
    $region12: #{tpu_custom_call.1} parent=1 // pred_region
      _
    $region13: #{tpu_custom_call.1} parent=1 // pred_fallthru
      _
    // Predicated region
    $region14: #{tpu_custom_call.1} parent=1 // pred_check
      _
    $region15: #{tpu_custom_call.1} parent=1 // pred_check_branch
      %43 = sbr.rel (0) target = $region17
    $region16: #{tpu_custom_call.1} parent=1 // pred_region
      %s45 = ssub.s32 1024, 1024
      %46 = vsyncadd [#allocation6], %s45
      %s47 = sshll.u32 [#allocation7], 4
      %s48 = int_to_ptr.vmem [resolvable:$true] %s47
      %53 = dma.hbm_to_vmem [thread:$0]  %s3, 1024, %s48, [#allocation6], 64, 64, 4
    $region17: #{tpu_custom_call.1} parent=1 // pred_fallthru
      _
    // Predicated region
    $region18: #{tpu_custom_call.1} parent=1 // pred_check
      _
    $region19: #{tpu_custom_call.1} parent=1 // pred_check_branch
      %55 = sbr.rel (0) target = $region21
    $region20: #{tpu_custom_call.1} parent=1 // pred_region
      _
    $region21: #{tpu_custom_call.1} parent=1 // pred_fallthru
      _
    // Predicated region
    $region22: #{tpu_custom_call.1} parent=1 // pred_check
      _
    $region23: #{tpu_custom_call.1} parent=1 // pred_check_branch
      %57 = sbr.rel (0) target = $region25
    $region24: #{tpu_custom_call.1} parent=1 // pred_region
      %58 = dma.done [#allocation3], 4608
    $region25: #{tpu_custom_call.1} parent=1 // pred_fallthru
      _
    // Predicated region
    $region26: #{tpu_custom_call.1} parent=1 // pred_check
      _
    $region27: #{tpu_custom_call.1} parent=1 // pred_check_branch
      %60 = sbr.rel (0) target = $region29
    $region28: #{tpu_custom_call.1} parent=1 // pred_region
      %61 = dma.done [#allocation6], 18432
    $region29: #{tpu_custom_call.1} parent=1 // pred_fallthru
      _
    // Predicated region
    $region30: #{tpu_custom_call.1} parent=1 // pred_check
      _
    $region31: #{tpu_custom_call.1} parent=1 // pred_check_branch
      %63 = sbr.rel (0) target = $region33
    $region32: #{tpu_custom_call.1} parent=1 // pred_region
      %64 = dma.done [#allocation6], 1024
    $region33: #{tpu_custom_call.1} parent=1 // pred_fallthru
      _
    %v66 = vld [vmem:[#allocation2] sm:$0xff]
    %v67 = vld [vmem:[#allocation2 + $0x8] sm:$0xff]
    %v68 = vld [vmem:[#allocation2 + $0x10] sm:$0xff]
    %v69 = vld [vmem:[#allocation2 + $0x18] sm:$0xff]
    %v70 = vld [vmem:[#allocation2 + $0x20] sm:$0xff]
    %v71 = vld [vmem:[#allocation2 + $0x28] sm:$0xff]
    %v72 = vld [vmem:[#allocation2 + $0x30] sm:$0xff]
    %v73 = vld [vmem:[#allocation2 + $0x38] sm:$0xff]
    %v74 = vld [vmem:[#allocation2 + $0x40] sm:$0xff]
    %v75 = vld [vmem:[#allocation2 + $0x48] sm:$0xff]
    %v76 = vld [vmem:[#allocation2 + $0x50] sm:$0xff]
    %v77 = vld [vmem:[#allocation2 + $0x58] sm:$0xff]
    %v78 = vld [vmem:[#allocation2 + $0x60] sm:$0xff]
    %v79 = vld [vmem:[#allocation2 + $0x68] sm:$0xff]
    %v80 = vld [vmem:[#allocation2 + $0x70] sm:$0xff]
    %v81 = vld [vmem:[#allocation2 + $0x78] sm:$0xff]
    %v82 = vld [vmem:[#allocation2 + $0x80] sm:$0xff]
    %v83 = vld [vmem:[#allocation2 + $0x88] sm:$0xff]
    %v84 = vld [vmem:[#allocation2 + $0x90] sm:$0xff]
    %v85 = vld [vmem:[#allocation2 + $0x98] sm:$0xff]
    %v86 = vld [vmem:[#allocation2 + $0xa0] sm:$0xff]
    %v87 = vld [vmem:[#allocation2 + $0xa8] sm:$0xff]
    %v88 = vld [vmem:[#allocation2 + $0xb0] sm:$0xff]
    %v89 = vld [vmem:[#allocation2 + $0xb8] sm:$0xff]
    %v90 = vld [vmem:[#allocation2 + $0xc0] sm:$0xff]
    %v91 = vld [vmem:[#allocation2 + $0xc8] sm:$0xff]
    %v92 = vld [vmem:[#allocation2 + $0xd0] sm:$0xff]
    %v93 = vld [vmem:[#allocation2 + $0xd8] sm:$0xff]
    %v94 = vld [vmem:[#allocation2 + $0xe0] sm:$0xff]
    %v95 = vld [vmem:[#allocation2 + $0xe8] sm:$0xff]
    %v96 = vld [vmem:[#allocation2 + $0xf0] sm:$0xff]
    %v97 = vld [vmem:[#allocation2 + $0xf8] sm:$0xff]
    %v98 = vld [vmem:[#allocation2 + $0x100] sm:$0xff]
    %v99 = vld [vmem:[#allocation2 + $0x108] sm:$0xff]
    %v100 = vld [vmem:[#allocation2 + $0x110] sm:$0xff]
    %v101 = vld [vmem:[#allocation2 + $0x118] sm:$0xff]
    %v138 = vcombine.low %v66, %v75
    %v139 = vcombine.high %v66, %v75
    %v140 = vcombine.low %v67, %v76
    %v141 = vcombine.high %v67, %v76
    %v142 = vcombine.low %v68, %v77
    %v143 = vcombine.high %v68, %v77
    %v144 = vcombine.low %v69, %v78
    %v145 = vcombine.high %v69, %v78
    %v146 = vcombine.low %v70, %v79
    %v147 = vcombine.high %v70, %v79
    %v148 = vcombine.low %v71, %v80
    %v149 = vcombine.high %v71, %v80
    %v150 = vcombine.low %v72, %v81
    %v151 = vcombine.high %v72, %v81
    %v152 = vcombine.low %v73, %v82
    %v153 = vcombine.high %v73, %v82
    %v154 = vcombine.low %v74, %v83
    %v155 = vcombine.high %v74, %v83
    %v156 = vcombine.low %v84, %v93
    %v157 = vcombine.high %v84, %v93
    %v158 = vcombine.low %v85, %v94
    %v159 = vcombine.high %v85, %v94
    %v160 = vcombine.low %v86, %v95
    %v161 = vcombine.high %v86, %v95
    %v162 = vcombine.low %v87, %v96
    %v163 = vcombine.high %v87, %v96
    %v164 = vcombine.low %v88, %v97
    %v165 = vcombine.high %v88, %v97
    %v166 = vcombine.low %v89, %v98
    %v167 = vcombine.high %v89, %v98
    %v168 = vcombine.low %v90, %v99
    %v169 = vcombine.high %v90, %v99
    %v170 = vcombine.low %v91, %v100
    %v171 = vcombine.high %v91, %v100
    %v172 = vcombine.low %v92, %v101
    %v173 = vcombine.high %v92, %v101
    %v210 = vpack.c.bf16 %v156, %v138
    %v211 = vpack.c.bf16 %v157, %v139
    %v212 = vpack.c.bf16 %v158, %v140
    %v213 = vpack.c.bf16 %v159, %v141
    %v214 = vpack.c.bf16 %v160, %v142
    %v215 = vpack.c.bf16 %v161, %v143
    %v216 = vpack.c.bf16 %v162, %v144
    %v217 = vpack.c.bf16 %v163, %v145
    %v218 = vpack.c.bf16 %v164, %v146
    %v219 = vpack.c.bf16 %v165, %v147
    %v220 = vpack.c.bf16 %v166, %v148
    %v221 = vpack.c.bf16 %v167, %v149
    %v222 = vpack.c.bf16 %v168, %v150
    %v223 = vpack.c.bf16 %v169, %v151
    %v224 = vpack.c.bf16 %v170, %v152
    %v225 = vpack.c.bf16 %v171, %v153
    %v226 = vpack.c.bf16 %v172, %v154
    %v227 = vpack.c.bf16 %v173, %v155
    %v228 = vld [vmem:[#allocation5] sm:$0xf]
    %v229 = vld [vmem:[#allocation5 + $0x4] sm:$0xf]
    %v230 = vld [vmem:[#allocation5 + $0x8] sm:$0xf]
    %v231 = vld [vmem:[#allocation5 + $0xc] sm:$0xf]
    %v232 = vld [vmem:[#allocation5 + $0x10] sm:$0xf]
    %v233 = vld [vmem:[#allocation5 + $0x14] sm:$0xf]
    %v234 = vld [vmem:[#allocation5 + $0x18] sm:$0xf]
    %v235 = vld [vmem:[#allocation5 + $0x1c] sm:$0xf]
    %v236 = vld [vmem:[#allocation5 + $0x20] sm:$0xf]
    %v237 = vld [vmem:[#allocation5 + $0x24] sm:$0xf]
    %v238 = vld [vmem:[#allocation5 + $0x28] sm:$0xf]
    %v239 = vld [vmem:[#allocation5 + $0x2c] sm:$0xf]
    %v240 = vld [vmem:[#allocation5 + $0x30] sm:$0xf]
    %v241 = vld [vmem:[#allocation5 + $0x34] sm:$0xf]
    %v242 = vld [vmem:[#allocation5 + $0x38] sm:$0xf]
    %v243 = vld [vmem:[#allocation5 + $0x3c] sm:$0xf]
    %v244 = vld [vmem:[#allocation5 + $0x40] sm:$0xf]
    %v245 = vld [vmem:[#allocation5 + $0x44] sm:$0xf]
    %v246 = vld [vmem:[#allocation5 + $0x48] sm:$0xf]
    %v247 = vld [vmem:[#allocation5 + $0x4c] sm:$0xf]
    %v248 = vld [vmem:[#allocation5 + $0x50] sm:$0xf]
    %v249 = vld [vmem:[#allocation5 + $0x54] sm:$0xf]
    %v250 = vld [vmem:[#allocation5 + $0x58] sm:$0xf]
    %v251 = vld [vmem:[#allocation5 + $0x5c] sm:$0xf]
    %v252 = vld [vmem:[#allocation5 + $0x60] sm:$0xf]
    %v253 = vld [vmem:[#allocation5 + $0x64] sm:$0xf]
    %v254 = vld [vmem:[#allocation5 + $0x68] sm:$0xf]
    %v255 = vld [vmem:[#allocation5 + $0x6c] sm:$0xf]
    %v256 = vld [vmem:[#allocation5 + $0x70] sm:$0xf]
    %v257 = vld [vmem:[#allocation5 + $0x74] sm:$0xf]
    %v258 = vld [vmem:[#allocation5 + $0x78] sm:$0xf]
    %v259 = vld [vmem:[#allocation5 + $0x7c] sm:$0xf]
    %v260 = vld [vmem:[#allocation5 + $0x80] sm:$0xf]
    %v261 = vld [vmem:[#allocation5 + $0x84] sm:$0xf]
    %v262 = vld [vmem:[#allocation5 + $0x88] sm:$0xf]
    %v263 = vld [vmem:[#allocation5 + $0x8c] sm:$0xf]
    %v264 = vld [vmem:[#allocation5 + $0x90] sm:$0xf]
    %v265 = vld [vmem:[#allocation5 + $0x94] sm:$0xf]
    %v266 = vld [vmem:[#allocation5 + $0x98] sm:$0xf]
    %v267 = vld [vmem:[#allocation5 + $0x9c] sm:$0xf]
    %v268 = vld [vmem:[#allocation5 + $0xa0] sm:$0xf]
    %v269 = vld [vmem:[#allocation5 + $0xa4] sm:$0xf]
    %v270 = vld [vmem:[#allocation5 + $0xa8] sm:$0xf]
    %v271 = vld [vmem:[#allocation5 + $0xac] sm:$0xf]
    %v272 = vld [vmem:[#allocation5 + $0xb0] sm:$0xf]
    %v273 = vld [vmem:[#allocation5 + $0xb4] sm:$0xf]
    %v274 = vld [vmem:[#allocation5 + $0xb8] sm:$0xf]
    %v275 = vld [vmem:[#allocation5 + $0xbc] sm:$0xf]
    %v276 = vld [vmem:[#allocation5 + $0xc0] sm:$0xf]
    %v277 = vld [vmem:[#allocation5 + $0xc4] sm:$0xf]
    %v278 = vld [vmem:[#allocation5 + $0xc8] sm:$0xf]
    %v279 = vld [vmem:[#allocation5 + $0xcc] sm:$0xf]
    %v280 = vld [vmem:[#allocation5 + $0xd0] sm:$0xf]
    %v281 = vld [vmem:[#allocation5 + $0xd4] sm:$0xf]
    %v282 = vld [vmem:[#allocation5 + $0xd8] sm:$0xf]
    %v283 = vld [vmem:[#allocation5 + $0xdc] sm:$0xf]
    %v284 = vld [vmem:[#allocation5 + $0xe0] sm:$0xf]
    %v285 = vld [vmem:[#allocation5 + $0xe4] sm:$0xf]
    %v286 = vld [vmem:[#allocation5 + $0xe8] sm:$0xf]
    %v287 = vld [vmem:[#allocation5 + $0xec] sm:$0xf]
    %v288 = vld [vmem:[#allocation5 + $0xf0] sm:$0xf]
    %v289 = vld [vmem:[#allocation5 + $0xf4] sm:$0xf]
    %v290 = vld [vmem:[#allocation5 + $0xf8] sm:$0xf]
    %v291 = vld [vmem:[#allocation5 + $0xfc] sm:$0xf]
    %v292 = vld [vmem:[#allocation5 + $0x100] sm:$0xf]
    %v293 = vld [vmem:[#allocation5 + $0x104] sm:$0xf]
    %v294 = vld [vmem:[#allocation5 + $0x108] sm:$0xf]
    %v295 = vld [vmem:[#allocation5 + $0x10c] sm:$0xf]
    %v296 = vld [vmem:[#allocation5 + $0x110] sm:$0xf]
    %v297 = vld [vmem:[#allocation5 + $0x114] sm:$0xf]
    %v298 = vld [vmem:[#allocation5 + $0x118] sm:$0xf]
    %v299 = vld [vmem:[#allocation5 + $0x11c] sm:$0xf]
    %v300 = vld [vmem:[#allocation5 + $0x120] sm:$0xf]
    %v301 = vld [vmem:[#allocation5 + $0x124] sm:$0xf]
    %v302 = vld [vmem:[#allocation5 + $0x128] sm:$0xf]
    %v303 = vld [vmem:[#allocation5 + $0x12c] sm:$0xf]
    %v304 = vld [vmem:[#allocation5 + $0x130] sm:$0xf]
    %v305 = vld [vmem:[#allocation5 + $0x134] sm:$0xf]
    %v306 = vld [vmem:[#allocation5 + $0x138] sm:$0xf]
    %v307 = vld [vmem:[#allocation5 + $0x13c] sm:$0xf]
    %v308 = vld [vmem:[#allocation5 + $0x140] sm:$0xf]
    %v309 = vld [vmem:[#allocation5 + $0x144] sm:$0xf]
    %v310 = vld [vmem:[#allocation5 + $0x148] sm:$0xf]
    %v311 = vld [vmem:[#allocation5 + $0x14c] sm:$0xf]
    %v312 = vld [vmem:[#allocation5 + $0x150] sm:$0xf]
    %v313 = vld [vmem:[#allocation5 + $0x154] sm:$0xf]
    %v314 = vld [vmem:[#allocation5 + $0x158] sm:$0xf]
    %v315 = vld [vmem:[#allocation5 + $0x15c] sm:$0xf]
    %v316 = vld [vmem:[#allocation5 + $0x160] sm:$0xf]
    %v317 = vld [vmem:[#allocation5 + $0x164] sm:$0xf]
    %v318 = vld [vmem:[#allocation5 + $0x168] sm:$0xf]
    %v319 = vld [vmem:[#allocation5 + $0x16c] sm:$0xf]
    %v320 = vld [vmem:[#allocation5 + $0x170] sm:$0xf]
    %v321 = vld [vmem:[#allocation5 + $0x174] sm:$0xf]
    %v322 = vld [vmem:[#allocation5 + $0x178] sm:$0xf]
    %v323 = vld [vmem:[#allocation5 + $0x17c] sm:$0xf]
    %v324 = vld [vmem:[#allocation5 + $0x180] sm:$0xf]
    %v325 = vld [vmem:[#allocation5 + $0x184] sm:$0xf]
    %v326 = vld [vmem:[#allocation5 + $0x188] sm:$0xf]
    %v327 = vld [vmem:[#allocation5 + $0x18c] sm:$0xf]
    %v328 = vld [vmem:[#allocation5 + $0x190] sm:$0xf]
    %v329 = vld [vmem:[#allocation5 + $0x194] sm:$0xf]
    %v330 = vld [vmem:[#allocation5 + $0x198] sm:$0xf]
    %v331 = vld [vmem:[#allocation5 + $0x19c] sm:$0xf]
    %v332 = vld [vmem:[#allocation5 + $0x1a0] sm:$0xf]
    %v333 = vld [vmem:[#allocation5 + $0x1a4] sm:$0xf]
    %v334 = vld [vmem:[#allocation5 + $0x1a8] sm:$0xf]
    %v335 = vld [vmem:[#allocation5 + $0x1ac] sm:$0xf]
    %v336 = vld [vmem:[#allocation5 + $0x1b0] sm:$0xf]
    %v337 = vld [vmem:[#allocation5 + $0x1b4] sm:$0xf]
    %v338 = vld [vmem:[#allocation5 + $0x1b8] sm:$0xf]
    %v339 = vld [vmem:[#allocation5 + $0x1bc] sm:$0xf]
    %v340 = vld [vmem:[#allocation5 + $0x1c0] sm:$0xf]
    %v341 = vld [vmem:[#allocation5 + $0x1c4] sm:$0xf]
    %v342 = vld [vmem:[#allocation5 + $0x1c8] sm:$0xf]
    %v343 = vld [vmem:[#allocation5 + $0x1cc] sm:$0xf]
    %v344 = vld [vmem:[#allocation5 + $0x1d0] sm:$0xf]
    %v345 = vld [vmem:[#allocation5 + $0x1d4] sm:$0xf]
    %v346 = vld [vmem:[#allocation5 + $0x1d8] sm:$0xf]
    %v347 = vld [vmem:[#allocation5 + $0x1dc] sm:$0xf]
    %v348 = vld [vmem:[#allocation5 + $0x1e0] sm:$0xf]
    %v349 = vld [vmem:[#allocation5 + $0x1e4] sm:$0xf]
    %v350 = vld [vmem:[#allocation5 + $0x1e8] sm:$0xf]
    %v351 = vld [vmem:[#allocation5 + $0x1ec] sm:$0xf]
    %v352 = vld [vmem:[#allocation5 + $0x1f0] sm:$0xf]
    %v353 = vld [vmem:[#allocation5 + $0x1f4] sm:$0xf]
    %v354 = vld [vmem:[#allocation5 + $0x1f8] sm:$0xf]
    %v355 = vld [vmem:[#allocation5 + $0x1fc] sm:$0xf]
    %v356 = vld [vmem:[#allocation5 + $0x200] sm:$0xf]
    %v357 = vld [vmem:[#allocation5 + $0x204] sm:$0xf]
    %v358 = vld [vmem:[#allocation5 + $0x208] sm:$0xf]
    %v359 = vld [vmem:[#allocation5 + $0x20c] sm:$0xf]
    %v360 = vld [vmem:[#allocation5 + $0x210] sm:$0xf]
    %v361 = vld [vmem:[#allocation5 + $0x214] sm:$0xf]
    %v362 = vld [vmem:[#allocation5 + $0x218] sm:$0xf]
    %v363 = vld [vmem:[#allocation5 + $0x21c] sm:$0xf]
    %v364 = vld [vmem:[#allocation5 + $0x220] sm:$0xf]
    %v365 = vld [vmem:[#allocation5 + $0x224] sm:$0xf]
    %v366 = vld [vmem:[#allocation5 + $0x228] sm:$0xf]
    %v367 = vld [vmem:[#allocation5 + $0x22c] sm:$0xf]
    %v368 = vld [vmem:[#allocation5 + $0x230] sm:$0xf]
    %v369 = vld [vmem:[#allocation5 + $0x234] sm:$0xf]
    %v370 = vld [vmem:[#allocation5 + $0x238] sm:$0xf]
    %v371 = vld [vmem:[#allocation5 + $0x23c] sm:$0xf]
    %v372 = vld [vmem:[#allocation5 + $0x240] sm:$0xf]
    %v373 = vld [vmem:[#allocation5 + $0x244] sm:$0xf]
    %v374 = vld [vmem:[#allocation5 + $0x248] sm:$0xf]
    %v375 = vld [vmem:[#allocation5 + $0x24c] sm:$0xf]
    %v376 = vld [vmem:[#allocation5 + $0x250] sm:$0xf]
    %v377 = vld [vmem:[#allocation5 + $0x254] sm:$0xf]
    %v378 = vld [vmem:[#allocation5 + $0x258] sm:$0xf]
    %v379 = vld [vmem:[#allocation5 + $0x25c] sm:$0xf]
    %v380 = vld [vmem:[#allocation5 + $0x260] sm:$0xf]
    %v381 = vld [vmem:[#allocation5 + $0x264] sm:$0xf]
    %v382 = vld [vmem:[#allocation5 + $0x268] sm:$0xf]
    %v383 = vld [vmem:[#allocation5 + $0x26c] sm:$0xf]
    %v384 = vld [vmem:[#allocation5 + $0x270] sm:$0xf]
    %v385 = vld [vmem:[#allocation5 + $0x274] sm:$0xf]
    %v386 = vld [vmem:[#allocation5 + $0x278] sm:$0xf]
    %v387 = vld [vmem:[#allocation5 + $0x27c] sm:$0xf]
    %v388 = vld [vmem:[#allocation5 + $0x280] sm:$0xf]
    %v389 = vld [vmem:[#allocation5 + $0x284] sm:$0xf]
    %v390 = vld [vmem:[#allocation5 + $0x288] sm:$0xf]
    %v391 = vld [vmem:[#allocation5 + $0x28c] sm:$0xf]
    %v392 = vld [vmem:[#allocation5 + $0x290] sm:$0xf]
    %v393 = vld [vmem:[#allocation5 + $0x294] sm:$0xf]
    %v394 = vld [vmem:[#allocation5 + $0x298] sm:$0xf]
    %v395 = vld [vmem:[#allocation5 + $0x29c] sm:$0xf]
    %v396 = vld [vmem:[#allocation5 + $0x2a0] sm:$0xf]
    %v397 = vld [vmem:[#allocation5 + $0x2a4] sm:$0xf]
    %v398 = vld [vmem:[#allocation5 + $0x2a8] sm:$0xf]
    %v399 = vld [vmem:[#allocation5 + $0x2ac] sm:$0xf]
    %v400 = vld [vmem:[#allocation5 + $0x2b0] sm:$0xf]
    %v401 = vld [vmem:[#allocation5 + $0x2b4] sm:$0xf]
    %v402 = vld [vmem:[#allocation5 + $0x2b8] sm:$0xf]
    %v403 = vld [vmem:[#allocation5 + $0x2bc] sm:$0xf]
    %v404 = vld [vmem:[#allocation5 + $0x2c0] sm:$0xf]
    %v405 = vld [vmem:[#allocation5 + $0x2c4] sm:$0xf]
    %v406 = vld [vmem:[#allocation5 + $0x2c8] sm:$0xf]
    %v407 = vld [vmem:[#allocation5 + $0x2cc] sm:$0xf]
    %v408 = vld [vmem:[#allocation5 + $0x2d0] sm:$0xf]
    %v409 = vld [vmem:[#allocation5 + $0x2d4] sm:$0xf]
    %v410 = vld [vmem:[#allocation5 + $0x2d8] sm:$0xf]
    %v411 = vld [vmem:[#allocation5 + $0x2dc] sm:$0xf]
    %v412 = vld [vmem:[#allocation5 + $0x2e0] sm:$0xf]
    %v413 = vld [vmem:[#allocation5 + $0x2e4] sm:$0xf]
    %v414 = vld [vmem:[#allocation5 + $0x2e8] sm:$0xf]
    %v415 = vld [vmem:[#allocation5 + $0x2ec] sm:$0xf]
    %v416 = vld [vmem:[#allocation5 + $0x2f0] sm:$0xf]
    %v417 = vld [vmem:[#allocation5 + $0x2f4] sm:$0xf]
    %v418 = vld [vmem:[#allocation5 + $0x2f8] sm:$0xf]
    %v419 = vld [vmem:[#allocation5 + $0x2fc] sm:$0xf]
    %v420 = vld [vmem:[#allocation5 + $0x300] sm:$0xf]
    %v421 = vld [vmem:[#allocation5 + $0x304] sm:$0xf]
    %v422 = vld [vmem:[#allocation5 + $0x308] sm:$0xf]
    %v423 = vld [vmem:[#allocation5 + $0x30c] sm:$0xf]
    %v424 = vld [vmem:[#allocation5 + $0x310] sm:$0xf]
    %v425 = vld [vmem:[#allocation5 + $0x314] sm:$0xf]
    %v426 = vld [vmem:[#allocation5 + $0x318] sm:$0xf]
    %v427 = vld [vmem:[#allocation5 + $0x31c] sm:$0xf]
    %v428 = vld [vmem:[#allocation5 + $0x320] sm:$0xf]
    %v429 = vld [vmem:[#allocation5 + $0x324] sm:$0xf]
    %v430 = vld [vmem:[#allocation5 + $0x328] sm:$0xf]
    %v431 = vld [vmem:[#allocation5 + $0x32c] sm:$0xf]
    %v432 = vld [vmem:[#allocation5 + $0x330] sm:$0xf]
    %v433 = vld [vmem:[#allocation5 + $0x334] sm:$0xf]
    %v434 = vld [vmem:[#allocation5 + $0x338] sm:$0xf]
    %v435 = vld [vmem:[#allocation5 + $0x33c] sm:$0xf]
    %v436 = vld [vmem:[#allocation5 + $0x340] sm:$0xf]
    %v437 = vld [vmem:[#allocation5 + $0x344] sm:$0xf]
    %v438 = vld [vmem:[#allocation5 + $0x348] sm:$0xf]
    %v439 = vld [vmem:[#allocation5 + $0x34c] sm:$0xf]
    %v440 = vld [vmem:[#allocation5 + $0x350] sm:$0xf]
    %v441 = vld [vmem:[#allocation5 + $0x354] sm:$0xf]
    %v442 = vld [vmem:[#allocation5 + $0x358] sm:$0xf]
    %v443 = vld [vmem:[#allocation5 + $0x35c] sm:$0xf]
    %v444 = vld [vmem:[#allocation5 + $0x360] sm:$0xf]
    %v445 = vld [vmem:[#allocation5 + $0x364] sm:$0xf]
    %v446 = vld [vmem:[#allocation5 + $0x368] sm:$0xf]
    %v447 = vld [vmem:[#allocation5 + $0x36c] sm:$0xf]
    %v448 = vld [vmem:[#allocation5 + $0x370] sm:$0xf]
    %v449 = vld [vmem:[#allocation5 + $0x374] sm:$0xf]
    %v450 = vld [vmem:[#allocation5 + $0x378] sm:$0xf]
    %v451 = vld [vmem:[#allocation5 + $0x37c] sm:$0xf]
    %v452 = vld [vmem:[#allocation5 + $0x380] sm:$0xf]
    %v453 = vld [vmem:[#allocation5 + $0x384] sm:$0xf]
    %v454 = vld [vmem:[#allocation5 + $0x388] sm:$0xf]
    %v455 = vld [vmem:[#allocation5 + $0x38c] sm:$0xf]
    %v456 = vld [vmem:[#allocation5 + $0x390] sm:$0xf]
    %v457 = vld [vmem:[#allocation5 + $0x394] sm:$0xf]
    %v458 = vld [vmem:[#allocation5 + $0x398] sm:$0xf]
    %v459 = vld [vmem:[#allocation5 + $0x39c] sm:$0xf]
    %v460 = vld [vmem:[#allocation5 + $0x3a0] sm:$0xf]
    %v461 = vld [vmem:[#allocation5 + $0x3a4] sm:$0xf]
    %v462 = vld [vmem:[#allocation5 + $0x3a8] sm:$0xf]
    %v463 = vld [vmem:[#allocation5 + $0x3ac] sm:$0xf]
    %v464 = vld [vmem:[#allocation5 + $0x3b0] sm:$0xf]
    %v465 = vld [vmem:[#allocation5 + $0x3b4] sm:$0xf]
    %v466 = vld [vmem:[#allocation5 + $0x3b8] sm:$0xf]
    %v467 = vld [vmem:[#allocation5 + $0x3bc] sm:$0xf]
    %v468 = vld [vmem:[#allocation5 + $0x3c0] sm:$0xf]
    %v469 = vld [vmem:[#allocation5 + $0x3c4] sm:$0xf]
    %v470 = vld [vmem:[#allocation5 + $0x3c8] sm:$0xf]
    %v471 = vld [vmem:[#allocation5 + $0x3cc] sm:$0xf]
    %v472 = vld [vmem:[#allocation5 + $0x3d0] sm:$0xf]
    %v473 = vld [vmem:[#allocation5 + $0x3d4] sm:$0xf]
    %v474 = vld [vmem:[#allocation5 + $0x3d8] sm:$0xf]
    %v475 = vld [vmem:[#allocation5 + $0x3dc] sm:$0xf]
    %v476 = vld [vmem:[#allocation5 + $0x3e0] sm:$0xf]
    %v477 = vld [vmem:[#allocation5 + $0x3e4] sm:$0xf]
    %v478 = vld [vmem:[#allocation5 + $0x3e8] sm:$0xf]
    %v479 = vld [vmem:[#allocation5 + $0x3ec] sm:$0xf]
    %v480 = vld [vmem:[#allocation5 + $0x3f0] sm:$0xf]
    %v481 = vld [vmem:[#allocation5 + $0x3f4] sm:$0xf]
    %v482 = vld [vmem:[#allocation5 + $0x3f8] sm:$0xf]
    %v483 = vld [vmem:[#allocation5 + $0x3fc] sm:$0xf]
    %v484 = vld [vmem:[#allocation5 + $0x400] sm:$0xf]
    %v485 = vld [vmem:[#allocation5 + $0x404] sm:$0xf]
    %v486 = vld [vmem:[#allocation5 + $0x408] sm:$0xf]
    %v487 = vld [vmem:[#allocation5 + $0x40c] sm:$0xf]
    %v488 = vld [vmem:[#allocation5 + $0x410] sm:$0xf]
    %v489 = vld [vmem:[#allocation5 + $0x414] sm:$0xf]
    %v490 = vld [vmem:[#allocation5 + $0x418] sm:$0xf]
    %v491 = vld [vmem:[#allocation5 + $0x41c] sm:$0xf]
    %v492 = vld [vmem:[#allocation5 + $0x420] sm:$0xf]
    %v493 = vld [vmem:[#allocation5 + $0x424] sm:$0xf]
    %v494 = vld [vmem:[#allocation5 + $0x428] sm:$0xf]
    %v495 = vld [vmem:[#allocation5 + $0x42c] sm:$0xf]
    %v496 = vld [vmem:[#allocation5 + $0x430] sm:$0xf]
    %v497 = vld [vmem:[#allocation5 + $0x434] sm:$0xf]
    %v498 = vld [vmem:[#allocation5 + $0x438] sm:$0xf]
    %v499 = vld [vmem:[#allocation5 + $0x43c] sm:$0xf]
    %v500 = vld [vmem:[#allocation5 + $0x440] sm:$0xf]
    %v501 = vld [vmem:[#allocation5 + $0x444] sm:$0xf]
    %v502 = vld [vmem:[#allocation5 + $0x448] sm:$0xf]
    %v503 = vld [vmem:[#allocation5 + $0x44c] sm:$0xf]
    %v504 = vld [vmem:[#allocation5 + $0x450] sm:$0xf]
    %v505 = vld [vmem:[#allocation5 + $0x454] sm:$0xf]
    %v506 = vld [vmem:[#allocation5 + $0x458] sm:$0xf]
    %v507 = vld [vmem:[#allocation5 + $0x45c] sm:$0xf]
    %v508 = vld [vmem:[#allocation5 + $0x460] sm:$0xf]
    %v509 = vld [vmem:[#allocation5 + $0x464] sm:$0xf]
    %v510 = vld [vmem:[#allocation5 + $0x468] sm:$0xf]
    %v511 = vld [vmem:[#allocation5 + $0x46c] sm:$0xf]
    %v512 = vld [vmem:[#allocation5 + $0x470] sm:$0xf]
    %v513 = vld [vmem:[#allocation5 + $0x474] sm:$0xf]
    %v514 = vld [vmem:[#allocation5 + $0x478] sm:$0xf]
    %v515 = vld [vmem:[#allocation5 + $0x47c] sm:$0xf]
    %v516 = vld [vmem:[%s2] sm:$0x1]
    %v518 = vlaneseq
    %v519 = vshrl.u32 %v518, 7
    %v520 = vsub.s32 0, %v519
    %v521 = vrot.slane %v516, %v520
    %v811 = vunpack.c.l.b16 %v228
    %v812 = vunpack.c.l.b16 %v229
    %v813 = vunpack.c.l.b16 %v230
    %v814 = vunpack.c.l.b16 %v231
    %v815 = vunpack.c.l.b16 %v232
    %v816 = vunpack.c.l.b16 %v233
    %v817 = vunpack.c.l.b16 %v234
    %v818 = vunpack.c.l.b16 %v235
    %v819 = vunpack.c.l.b16 %v236
    %v820 = vunpack.c.l.b16 %v237
    %v821 = vunpack.c.l.b16 %v238
    %v822 = vunpack.c.l.b16 %v239
    %v823 = vunpack.c.l.b16 %v240
    %v824 = vunpack.c.l.b16 %v241
    %v825 = vunpack.c.l.b16 %v242
    %v826 = vunpack.c.l.b16 %v243
    %v827 = vunpack.c.l.b16 %v244
    %v828 = vunpack.c.l.b16 %v245
    %v829 = vunpack.c.l.b16 %v246
    %v830 = vunpack.c.l.b16 %v247
    %v831 = vunpack.c.l.b16 %v248
    %v832 = vunpack.c.l.b16 %v249
    %v833 = vunpack.c.l.b16 %v250
    %v834 = vunpack.c.l.b16 %v251
    %v835 = vunpack.c.l.b16 %v252
    %v836 = vunpack.c.l.b16 %v253
    %v837 = vunpack.c.l.b16 %v254
    %v838 = vunpack.c.l.b16 %v255
    %v839 = vunpack.c.l.b16 %v256
    %v840 = vunpack.c.l.b16 %v257
    %v841 = vunpack.c.l.b16 %v258
    %v842 = vunpack.c.l.b16 %v259
    %v843 = vunpack.c.l.b16 %v260
    %v844 = vunpack.c.l.b16 %v261
    %v845 = vunpack.c.l.b16 %v262
    %v846 = vunpack.c.l.b16 %v263
    %v847 = vunpack.c.l.b16 %v264
    %v848 = vunpack.c.l.b16 %v265
    %v849 = vunpack.c.l.b16 %v266
    %v850 = vunpack.c.l.b16 %v267
    %v851 = vunpack.c.l.b16 %v268
    %v852 = vunpack.c.l.b16 %v269
    %v853 = vunpack.c.l.b16 %v270
    %v854 = vunpack.c.l.b16 %v271
    %v855 = vunpack.c.l.b16 %v272
    %v856 = vunpack.c.l.b16 %v273
    %v857 = vunpack.c.l.b16 %v274
    %v858 = vunpack.c.l.b16 %v275
    %v859 = vunpack.c.l.b16 %v276
    %v860 = vunpack.c.l.b16 %v277
    %v861 = vunpack.c.l.b16 %v278
    %v862 = vunpack.c.l.b16 %v279
    %v863 = vunpack.c.l.b16 %v280
    %v864 = vunpack.c.l.b16 %v281
    %v865 = vunpack.c.l.b16 %v282
    %v866 = vunpack.c.l.b16 %v283
    %v867 = vunpack.c.l.b16 %v284
    %v868 = vunpack.c.l.b16 %v285
    %v869 = vunpack.c.l.b16 %v286
    %v870 = vunpack.c.l.b16 %v287
    %v871 = vunpack.c.l.b16 %v288
    %v872 = vunpack.c.l.b16 %v289
    %v873 = vunpack.c.l.b16 %v290
    %v874 = vunpack.c.l.b16 %v291
    %v875 = vunpack.c.l.b16 %v292
    %v876 = vunpack.c.l.b16 %v293
    %v877 = vunpack.c.l.b16 %v294
    %v878 = vunpack.c.l.b16 %v295
    %v879 = vunpack.c.l.b16 %v296
    %v880 = vunpack.c.l.b16 %v297
    %v881 = vunpack.c.l.b16 %v298
    %v882 = vunpack.c.l.b16 %v299
    %v883 = vunpack.c.l.b16 %v300
    %v884 = vunpack.c.l.b16 %v301
    %v885 = vunpack.c.l.b16 %v302
    %v886 = vunpack.c.l.b16 %v303
    %v887 = vunpack.c.l.b16 %v304
    %v888 = vunpack.c.l.b16 %v305
    %v889 = vunpack.c.l.b16 %v306
    %v890 = vunpack.c.l.b16 %v307
    %v891 = vunpack.c.l.b16 %v308
    %v892 = vunpack.c.l.b16 %v309
    %v893 = vunpack.c.l.b16 %v310
    %v894 = vunpack.c.l.b16 %v311
    %v895 = vunpack.c.l.b16 %v312
    %v896 = vunpack.c.l.b16 %v313
    %v897 = vunpack.c.l.b16 %v314
    %v898 = vunpack.c.l.b16 %v315
    %v899 = vunpack.c.l.b16 %v316
    %v900 = vunpack.c.l.b16 %v317
    %v901 = vunpack.c.l.b16 %v318
    %v902 = vunpack.c.l.b16 %v319
    %v903 = vunpack.c.l.b16 %v320
    %v904 = vunpack.c.l.b16 %v321
    %v905 = vunpack.c.l.b16 %v322
    %v906 = vunpack.c.l.b16 %v323
    %v907 = vunpack.c.l.b16 %v324
    %v908 = vunpack.c.l.b16 %v325
    %v909 = vunpack.c.l.b16 %v326
    %v910 = vunpack.c.l.b16 %v327
    %v911 = vunpack.c.l.b16 %v328
    %v912 = vunpack.c.l.b16 %v329
    %v913 = vunpack.c.l.b16 %v330
    %v914 = vunpack.c.l.b16 %v331
    %v915 = vunpack.c.l.b16 %v332
    %v916 = vunpack.c.l.b16 %v333
    %v917 = vunpack.c.l.b16 %v334
    %v918 = vunpack.c.l.b16 %v335
    %v919 = vunpack.c.l.b16 %v336
    %v920 = vunpack.c.l.b16 %v337
    %v921 = vunpack.c.l.b16 %v338
    %v922 = vunpack.c.l.b16 %v339
    %v923 = vunpack.c.l.b16 %v340
    %v924 = vunpack.c.l.b16 %v341
    %v925 = vunpack.c.l.b16 %v342
    %v926 = vunpack.c.l.b16 %v343
    %v927 = vunpack.c.l.b16 %v344
    %v928 = vunpack.c.l.b16 %v345
    %v929 = vunpack.c.l.b16 %v346
    %v930 = vunpack.c.l.b16 %v347
    %v931 = vunpack.c.l.b16 %v348
    %v932 = vunpack.c.l.b16 %v349
    %v933 = vunpack.c.l.b16 %v350
    %v934 = vunpack.c.l.b16 %v351
    %v935 = vunpack.c.l.b16 %v352
    %v936 = vunpack.c.l.b16 %v353
    %v937 = vunpack.c.l.b16 %v354
    %v938 = vunpack.c.l.b16 %v355
    %v939 = vunpack.c.l.b16 %v356
    %v940 = vunpack.c.l.b16 %v357
    %v941 = vunpack.c.l.b16 %v358
    %v942 = vunpack.c.l.b16 %v359
    %v943 = vunpack.c.l.b16 %v360
    %v944 = vunpack.c.l.b16 %v361
    %v945 = vunpack.c.l.b16 %v362
    %v946 = vunpack.c.l.b16 %v363
    %v947 = vunpack.c.l.b16 %v364
    %v948 = vunpack.c.l.b16 %v365
    %v949 = vunpack.c.l.b16 %v366
    %v950 = vunpack.c.l.b16 %v367
    %v951 = vunpack.c.l.b16 %v368
    %v952 = vunpack.c.l.b16 %v369
    %v953 = vunpack.c.l.b16 %v370
    %v954 = vunpack.c.l.b16 %v371
    %v955 = vunpack.c.l.b16 %v372
    %v956 = vunpack.c.l.b16 %v373
    %v957 = vunpack.c.l.b16 %v374
    %v958 = vunpack.c.l.b16 %v375
    %v959 = vunpack.c.l.b16 %v376
    %v960 = vunpack.c.l.b16 %v377
    %v961 = vunpack.c.l.b16 %v378
    %v962 = vunpack.c.l.b16 %v379
    %v963 = vunpack.c.l.b16 %v380
    %v964 = vunpack.c.l.b16 %v381
    %v965 = vunpack.c.l.b16 %v382
    %v966 = vunpack.c.l.b16 %v383
    %v967 = vunpack.c.l.b16 %v384
    %v968 = vunpack.c.l.b16 %v385
    %v969 = vunpack.c.l.b16 %v386
    %v970 = vunpack.c.l.b16 %v387
    %v971 = vunpack.c.l.b16 %v388
    %v972 = vunpack.c.l.b16 %v389
    %v973 = vunpack.c.l.b16 %v390
    %v974 = vunpack.c.l.b16 %v391
    %v975 = vunpack.c.l.b16 %v392
    %v976 = vunpack.c.l.b16 %v393
    %v977 = vunpack.c.l.b16 %v394
    %v978 = vunpack.c.l.b16 %v395
    %v979 = vunpack.c.l.b16 %v396
    %v980 = vunpack.c.l.b16 %v397
    %v981 = vunpack.c.l.b16 %v398
    %v982 = vunpack.c.l.b16 %v399
    %v983 = vunpack.c.l.b16 %v400
    %v984 = vunpack.c.l.b16 %v401
    %v985 = vunpack.c.l.b16 %v402
    %v986 = vunpack.c.l.b16 %v403
    %v987 = vunpack.c.l.b16 %v404
    %v988 = vunpack.c.l.b16 %v405
    %v989 = vunpack.c.l.b16 %v406
    %v990 = vunpack.c.l.b16 %v407
    %v991 = vunpack.c.l.b16 %v408
    %v992 = vunpack.c.l.b16 %v409
    %v993 = vunpack.c.l.b16 %v410
    %v994 = vunpack.c.l.b16 %v411
    %v995 = vunpack.c.l.b16 %v412
    %v996 = vunpack.c.l.b16 %v413
    %v997 = vunpack.c.l.b16 %v414
    %v998 = vunpack.c.l.b16 %v415
    %v999 = vunpack.c.l.b16 %v416
    %v1000 = vunpack.c.l.b16 %v417
    %v1001 = vunpack.c.l.b16 %v418
    %v1002 = vunpack.c.l.b16 %v419
    %v1003 = vunpack.c.l.b16 %v420
    %v1004 = vunpack.c.l.b16 %v421
    %v1005 = vunpack.c.l.b16 %v422
    %v1006 = vunpack.c.l.b16 %v423
    %v1007 = vunpack.c.l.b16 %v424
    %v1008 = vunpack.c.l.b16 %v425
    %v1009 = vunpack.c.l.b16 %v426
    %v1010 = vunpack.c.l.b16 %v427
    %v1011 = vunpack.c.l.b16 %v428
    %v1012 = vunpack.c.l.b16 %v429
    %v1013 = vunpack.c.l.b16 %v430
    %v1014 = vunpack.c.l.b16 %v431
    %v1015 = vunpack.c.l.b16 %v432
    %v1016 = vunpack.c.l.b16 %v433
    %v1017 = vunpack.c.l.b16 %v434
    %v1018 = vunpack.c.l.b16 %v435
    %v1019 = vunpack.c.l.b16 %v436
    %v1020 = vunpack.c.l.b16 %v437
    %v1021 = vunpack.c.l.b16 %v438
    %v1022 = vunpack.c.l.b16 %v439
    %v1023 = vunpack.c.l.b16 %v440
    %v1024 = vunpack.c.l.b16 %v441
    %v1025 = vunpack.c.l.b16 %v442
    %v1026 = vunpack.c.l.b16 %v443
    %v1027 = vunpack.c.l.b16 %v444
    %v1028 = vunpack.c.l.b16 %v445
    %v1029 = vunpack.c.l.b16 %v446
    %v1030 = vunpack.c.l.b16 %v447
    %v1031 = vunpack.c.l.b16 %v448
    %v1032 = vunpack.c.l.b16 %v449
    %v1033 = vunpack.c.l.b16 %v450
    %v1034 = vunpack.c.l.b16 %v451
    %v1035 = vunpack.c.l.b16 %v452
    %v1036 = vunpack.c.l.b16 %v453
    %v1037 = vunpack.c.l.b16 %v454
    %v1038 = vunpack.c.l.b16 %v455
    %v1039 = vunpack.c.l.b16 %v456
    %v1040 = vunpack.c.l.b16 %v457
    %v1041 = vunpack.c.l.b16 %v458
    %v1042 = vunpack.c.l.b16 %v459
    %v1043 = vunpack.c.l.b16 %v460
    %v1044 = vunpack.c.l.b16 %v461
    %v1045 = vunpack.c.l.b16 %v462
    %v1046 = vunpack.c.l.b16 %v463
    %v1047 = vunpack.c.l.b16 %v464
    %v1048 = vunpack.c.l.b16 %v465
    %v1049 = vunpack.c.l.b16 %v466
    %v1050 = vunpack.c.l.b16 %v467
    %v1051 = vunpack.c.l.b16 %v468
    %v1052 = vunpack.c.l.b16 %v469
    %v1053 = vunpack.c.l.b16 %v470
    %v1054 = vunpack.c.l.b16 %v471
    %v1055 = vunpack.c.l.b16 %v472
    %v1056 = vunpack.c.l.b16 %v473
    %v1057 = vunpack.c.l.b16 %v474
    %v1058 = vunpack.c.l.b16 %v475
    %v1059 = vunpack.c.l.b16 %v476
    %v1060 = vunpack.c.l.b16 %v477
    %v1061 = vunpack.c.l.b16 %v478
    %v1062 = vunpack.c.l.b16 %v479
    %v1063 = vunpack.c.l.b16 %v480
    %v1064 = vunpack.c.l.b16 %v481
    %v1065 = vunpack.c.l.b16 %v482
    %v1066 = vunpack.c.l.b16 %v483
    %v1067 = vunpack.c.l.b16 %v484
    %v1068 = vunpack.c.l.b16 %v485
    %v1069 = vunpack.c.l.b16 %v486
    %v1070 = vunpack.c.l.b16 %v487
    %v1071 = vunpack.c.l.b16 %v488
    %v1072 = vunpack.c.l.b16 %v489
    %v1073 = vunpack.c.l.b16 %v490
    %v1074 = vunpack.c.l.b16 %v491
    %v1075 = vunpack.c.l.b16 %v492
    %v1076 = vunpack.c.l.b16 %v493
    %v1077 = vunpack.c.l.b16 %v494
    %v1078 = vunpack.c.l.b16 %v495
    %v1079 = vunpack.c.l.b16 %v496
    %v1080 = vunpack.c.l.b16 %v497
    %v1081 = vunpack.c.l.b16 %v498
    %v1082 = vunpack.c.l.b16 %v499
    %v1083 = vunpack.c.l.b16 %v500
    %v1084 = vunpack.c.l.b16 %v501
    %v1085 = vunpack.c.l.b16 %v502
    %v1086 = vunpack.c.l.b16 %v503
    %v1087 = vunpack.c.l.b16 %v504
    %v1088 = vunpack.c.l.b16 %v505
    %v1089 = vunpack.c.l.b16 %v506
    %v1090 = vunpack.c.l.b16 %v507
    %v1091 = vunpack.c.l.b16 %v508
    %v1092 = vunpack.c.l.b16 %v509
    %v1093 = vunpack.c.l.b16 %v510
    %v1094 = vunpack.c.l.b16 %v511
    %v1095 = vunpack.c.l.b16 %v512
    %v1096 = vunpack.c.l.b16 %v513
    %v1097 = vunpack.c.l.b16 %v514
    %v1098 = vunpack.c.l.b16 %v515
    %v1099 = vpack.c.b16 %v812, %v811
    %v1100 = vpack.c.b16 %v814, %v813
    %v1101 = vpack.c.b16 %v816, %v815
    %v1102 = vpack.c.b16 %v818, %v817
    %v1103 = vpack.c.b16 %v820, %v819
    %v1104 = vpack.c.b16 %v822, %v821
    %v1105 = vpack.c.b16 %v824, %v823
    %v1106 = vpack.c.b16 %v826, %v825
    %v1107 = vpack.c.b16 %v828, %v827
    %v1108 = vpack.c.b16 %v830, %v829
    %v1109 = vpack.c.b16 %v832, %v831
    %v1110 = vpack.c.b16 %v834, %v833
    %v1111 = vpack.c.b16 %v836, %v835
    %v1112 = vpack.c.b16 %v838, %v837
    %v1113 = vpack.c.b16 %v840, %v839
    %v1114 = vpack.c.b16 %v842, %v841
    %v1115 = vpack.c.b16 %v844, %v843
    %v1116 = vpack.c.b16 %v846, %v845
    %v1117 = vpack.c.b16 %v848, %v847
    %v1118 = vpack.c.b16 %v850, %v849
    %v1119 = vpack.c.b16 %v852, %v851
    %v1120 = vpack.c.b16 %v854, %v853
    %v1121 = vpack.c.b16 %v856, %v855
    %v1122 = vpack.c.b16 %v858, %v857
    %v1123 = vpack.c.b16 %v860, %v859
    %v1124 = vpack.c.b16 %v862, %v861
    %v1125 = vpack.c.b16 %v864, %v863
    %v1126 = vpack.c.b16 %v866, %v865
    %v1127 = vpack.c.b16 %v868, %v867
    %v1128 = vpack.c.b16 %v870, %v869
    %v1129 = vpack.c.b16 %v872, %v871
    %v1130 = vpack.c.b16 %v874, %v873
    %v1131 = vpack.c.b16 %v876, %v875
    %v1132 = vpack.c.b16 %v878, %v877
    %v1133 = vpack.c.b16 %v880, %v879
    %v1134 = vpack.c.b16 %v882, %v881
    %v1135 = vpack.c.b16 %v884, %v883
    %v1136 = vpack.c.b16 %v886, %v885
    %v1137 = vpack.c.b16 %v888, %v887
    %v1138 = vpack.c.b16 %v890, %v889
    %v1139 = vpack.c.b16 %v892, %v891
    %v1140 = vpack.c.b16 %v894, %v893
    %v1141 = vpack.c.b16 %v896, %v895
    %v1142 = vpack.c.b16 %v898, %v897
    %v1143 = vpack.c.b16 %v900, %v899
    %v1144 = vpack.c.b16 %v902, %v901
    %v1145 = vpack.c.b16 %v904, %v903
    %v1146 = vpack.c.b16 %v906, %v905
    %v1147 = vpack.c.b16 %v908, %v907
    %v1148 = vpack.c.b16 %v910, %v909
    %v1149 = vpack.c.b16 %v912, %v911
    %v1150 = vpack.c.b16 %v914, %v913
    %v1151 = vpack.c.b16 %v916, %v915
    %v1152 = vpack.c.b16 %v918, %v917
    %v1153 = vpack.c.b16 %v920, %v919
    %v1154 = vpack.c.b16 %v922, %v921
    %v1155 = vpack.c.b16 %v924, %v923
    %v1156 = vpack.c.b16 %v926, %v925
    %v1157 = vpack.c.b16 %v928, %v927
    %v1158 = vpack.c.b16 %v930, %v929
    %v1159 = vpack.c.b16 %v932, %v931
    %v1160 = vpack.c.b16 %v934, %v933
    %v1161 = vpack.c.b16 %v936, %v935
    %v1162 = vpack.c.b16 %v938, %v937
    %v1163 = vpack.c.b16 %v940, %v939
    %v1164 = vpack.c.b16 %v942, %v941
    %v1165 = vpack.c.b16 %v944, %v943
    %v1166 = vpack.c.b16 %v946, %v945
    %v1167 = vpack.c.b16 %v948, %v947
    %v1168 = vpack.c.b16 %v950, %v949
    %v1169 = vpack.c.b16 %v952, %v951
    %v1170 = vpack.c.b16 %v954, %v953
    %v1171 = vpack.c.b16 %v956, %v955
    %v1172 = vpack.c.b16 %v958, %v957
    %v1173 = vpack.c.b16 %v960, %v959
    %v1174 = vpack.c.b16 %v962, %v961
    %v1175 = vpack.c.b16 %v964, %v963
    %v1176 = vpack.c.b16 %v966, %v965
    %v1177 = vpack.c.b16 %v968, %v967
    %v1178 = vpack.c.b16 %v970, %v969
    %v1179 = vpack.c.b16 %v972, %v971
    %v1180 = vpack.c.b16 %v974, %v973
    %v1181 = vpack.c.b16 %v976, %v975
    %v1182 = vpack.c.b16 %v978, %v977
    %v1183 = vpack.c.b16 %v980, %v979
    %v1184 = vpack.c.b16 %v982, %v981
    %v1185 = vpack.c.b16 %v984, %v983
    %v1186 = vpack.c.b16 %v986, %v985
    %v1187 = vpack.c.b16 %v988, %v987
    %v1188 = vpack.c.b16 %v990, %v989
    %v1189 = vpack.c.b16 %v992, %v991
    %v1190 = vpack.c.b16 %v994, %v993
    %v1191 = vpack.c.b16 %v996, %v995
    %v1192 = vpack.c.b16 %v998, %v997
    %v1193 = vpack.c.b16 %v1000, %v999
    %v1194 = vpack.c.b16 %v1002, %v1001
    %v1195 = vpack.c.b16 %v1004, %v1003
    %v1196 = vpack.c.b16 %v1006, %v1005
    %v1197 = vpack.c.b16 %v1008, %v1007
    %v1198 = vpack.c.b16 %v1010, %v1009
    %v1199 = vpack.c.b16 %v1012, %v1011
    %v1200 = vpack.c.b16 %v1014, %v1013
    %v1201 = vpack.c.b16 %v1016, %v1015
    %v1202 = vpack.c.b16 %v1018, %v1017
    %v1203 = vpack.c.b16 %v1020, %v1019
    %v1204 = vpack.c.b16 %v1022, %v1021
    %v1205 = vpack.c.b16 %v1024, %v1023
    %v1206 = vpack.c.b16 %v1026, %v1025
    %v1207 = vpack.c.b16 %v1028, %v1027
    %v1208 = vpack.c.b16 %v1030, %v1029
    %v1209 = vpack.c.b16 %v1032, %v1031
    %v1210 = vpack.c.b16 %v1034, %v1033
    %v1211 = vpack.c.b16 %v1036, %v1035
    %v1212 = vpack.c.b16 %v1038, %v1037
    %v1213 = vpack.c.b16 %v1040, %v1039
    %v1214 = vpack.c.b16 %v1042, %v1041
    %v1215 = vpack.c.b16 %v1044, %v1043
    %v1216 = vpack.c.b16 %v1046, %v1045
    %v1217 = vpack.c.b16 %v1048, %v1047
    %v1218 = vpack.c.b16 %v1050, %v1049
    %v1219 = vpack.c.b16 %v1052, %v1051
    %v1220 = vpack.c.b16 %v1054, %v1053
    %v1221 = vpack.c.b16 %v1056, %v1055
    %v1222 = vpack.c.b16 %v1058, %v1057
    %v1223 = vpack.c.b16 %v1060, %v1059
    %v1224 = vpack.c.b16 %v1062, %v1061
    %v1225 = vpack.c.b16 %v1064, %v1063
    %v1226 = vpack.c.b16 %v1066, %v1065
    %v1227 = vpack.c.b16 %v1068, %v1067
    %v1228 = vpack.c.b16 %v1070, %v1069
    %v1229 = vpack.c.b16 %v1072, %v1071
    %v1230 = vpack.c.b16 %v1074, %v1073
    %v1231 = vpack.c.b16 %v1076, %v1075
    %v1232 = vpack.c.b16 %v1078, %v1077
    %v1233 = vpack.c.b16 %v1080, %v1079
    %v1234 = vpack.c.b16 %v1082, %v1081
    %v1235 = vpack.c.b16 %v1084, %v1083
    %v1236 = vpack.c.b16 %v1086, %v1085
    %v1237 = vpack.c.b16 %v1088, %v1087
    %v1238 = vpack.c.b16 %v1090, %v1089
    %v1239 = vpack.c.b16 %v1092, %v1091
    %v1240 = vpack.c.b16 %v1094, %v1093
    %v1241 = vpack.c.b16 %v1096, %v1095
    %v1242 = vpack.c.b16 %v1098, %v1097
    %1387 = vmatprep.subr.bf16.mxu0 0
    %1388 = vmatpush1.bf16.msra.mxu0 %v1099
    %1389 = vmatprep.subr.bf16.mxu0 0
    %1390 = vmatpush1.bf16.msra.mxu0 %v1100
    %1391 = vmatprep.subr.bf16.mxu0 0
    %1392 = vmatpush1.bf16.msra.mxu0 %v1101
    %1393 = vmatprep.subr.bf16.mxu0 0
    %1394 = vmatpush1.bf16.msra.mxu0 %v1102
    %1395 = vmatprep.subr.bf16.mxu0 0
    %1396 = vmatpush1.bf16.msra.mxu0 %v1103
    %1397 = vmatprep.subr.bf16.mxu0 0
    %1398 = vmatpush1.bf16.msra.mxu0 %v1104
    %1399 = vmatprep.subr.bf16.mxu0 0
    %1400 = vmatpush1.bf16.msra.mxu0 %v1105
    %1401 = vmatprep.subr.bf16.mxu0 0
    %1402 = vmatpush1.bf16.msra.mxu0 %v1106
    %1403 = vmatprep.subr.bf16.mxu0 0
    %1404 = vmatpush1.bf16.msra.mxu0 %v1107
    %1405 = vmatprep.subr.bf16.mxu0 0
    %1406 = vmatpush1.bf16.msra.mxu0 %v1108
    %1407 = vmatprep.subr.bf16.mxu0 0
    %1408 = vmatpush1.bf16.msra.mxu0 %v1109
    %1409 = vmatprep.subr.bf16.mxu0 0
    %1410 = vmatpush1.bf16.msra.mxu0 %v1110
    %1411 = vmatprep.subr.bf16.mxu0 0
    %1412 = vmatpush1.bf16.msra.mxu0 %v1111
    %1413 = vmatprep.subr.bf16.mxu0 0
    %1414 = vmatpush1.bf16.msra.mxu0 %v1112
    %1415 = vmatprep.subr.bf16.mxu0 0
    %1416 = vmatpush1.bf16.msra.mxu0 %v1113
    %1417 = vmatprep.subr.bf16.mxu0 0
    %1418 = vmatpush1.bf16.msra.mxu0 %v1114
    %1419 = vmatprep.mubr.bf16.mxu0 %v211
    %1420 = vmatmul.mubr.bf16.gmra.mrb[0].mxu0 %v210
    %v1421 = vpop.f32.mrb[0].mxu0
    %v1422 = vadd.f32 %v521, %v1421
    %v1423 = vpop.f32.mrb[0].mxu0
    %v1424 = vpop.f32.mrb[0].mxu0
    %v1425 = vadd.f32 %v521, %v1424
    %v1426 = vpop.f32.mrb[0].mxu0
    %1427 = vdwg.mxu0
    %1428 = vmatprep.subr.bf16.mxu0 0
    %1429 = vmatpush1.bf16.msra.mxu0 %v1115
    %1430 = vmatprep.subr.bf16.mxu0 0
    %1431 = vmatpush1.bf16.msra.mxu0 %v1116
    %1432 = vmatprep.subr.bf16.mxu0 0
    %1433 = vmatpush1.bf16.msra.mxu0 %v1117
    %1434 = vmatprep.subr.bf16.mxu0 0
    %1435 = vmatpush1.bf16.msra.mxu0 %v1118
    %1436 = vmatprep.subr.bf16.mxu0 0
    %1437 = vmatpush1.bf16.msra.mxu0 %v1119
    %1438 = vmatprep.subr.bf16.mxu0 0
    %1439 = vmatpush1.bf16.msra.mxu0 %v1120
    %1440 = vmatprep.subr.bf16.mxu0 0
    %1441 = vmatpush1.bf16.msra.mxu0 %v1121
    %1442 = vmatprep.subr.bf16.mxu0 0
    %1443 = vmatpush1.bf16.msra.mxu0 %v1122
    %1444 = vmatprep.subr.bf16.mxu0 0
    %1445 = vmatpush1.bf16.msra.mxu0 %v1123
    %1446 = vmatprep.subr.bf16.mxu0 0
    %1447 = vmatpush1.bf16.msra.mxu0 %v1124
    %1448 = vmatprep.subr.bf16.mxu0 0
    %1449 = vmatpush1.bf16.msra.mxu0 %v1125
    %1450 = vmatprep.subr.bf16.mxu0 0
    %1451 = vmatpush1.bf16.msra.mxu0 %v1126
    %1452 = vmatprep.subr.bf16.mxu0 0
    %1453 = vmatpush1.bf16.msra.mxu0 %v1127
    %1454 = vmatprep.subr.bf16.mxu0 0
    %1455 = vmatpush1.bf16.msra.mxu0 %v1128
    %1456 = vmatprep.subr.bf16.mxu0 0
    %1457 = vmatpush1.bf16.msra.mxu0 %v1129
    %1458 = vmatprep.subr.bf16.mxu0 0
    %1459 = vmatpush1.bf16.msra.mxu0 %v1130
    %1460 = vmatprep.mubr.bf16.mxu0 %v213
    %1461 = vmatmul.mubr.bf16.gmra.mrb[0].mxu0 %v212
    %v1462 = vpop.f32.mrb[0].mxu0
    %v1463 = vadd.f32 %v1422, %v1462
    %v1464 = vpop.f32.mrb[0].mxu0
    %v1465 = vpop.f32.mrb[0].mxu0
    %v1466 = vadd.f32 %v1425, %v1465
    %v1467 = vpop.f32.mrb[0].mxu0
    %1468 = vdwg.mxu0
    %1469 = vmatprep.subr.bf16.mxu0 0
    %1470 = vmatpush1.bf16.msra.mxu0 %v1131
    %1471 = vmatprep.subr.bf16.mxu0 0
    %1472 = vmatpush1.bf16.msra.mxu0 %v1132
    %1473 = vmatprep.subr.bf16.mxu0 0
    %1474 = vmatpush1.bf16.msra.mxu0 %v1133
    %1475 = vmatprep.subr.bf16.mxu0 0
    %1476 = vmatpush1.bf16.msra.mxu0 %v1134
    %1477 = vmatprep.subr.bf16.mxu0 0
    %1478 = vmatpush1.bf16.msra.mxu0 %v1135
    %1479 = vmatprep.subr.bf16.mxu0 0
    %1480 = vmatpush1.bf16.msra.mxu0 %v1136
    %1481 = vmatprep.subr.bf16.mxu0 0
    %1482 = vmatpush1.bf16.msra.mxu0 %v1137
    %1483 = vmatprep.subr.bf16.mxu0 0
    %1484 = vmatpush1.bf16.msra.mxu0 %v1138
    %1485 = vmatprep.subr.bf16.mxu0 0
    %1486 = vmatpush1.bf16.msra.mxu0 %v1139
    %1487 = vmatprep.subr.bf16.mxu0 0
    %1488 = vmatpush1.bf16.msra.mxu0 %v1140
    %1489 = vmatprep.subr.bf16.mxu0 0
    %1490 = vmatpush1.bf16.msra.mxu0 %v1141
    %1491 = vmatprep.subr.bf16.mxu0 0
    %1492 = vmatpush1.bf16.msra.mxu0 %v1142
    %1493 = vmatprep.subr.bf16.mxu0 0
    %1494 = vmatpush1.bf16.msra.mxu0 %v1143
    %1495 = vmatprep.subr.bf16.mxu0 0
    %1496 = vmatpush1.bf16.msra.mxu0 %v1144
    %1497 = vmatprep.subr.bf16.mxu0 0
    %1498 = vmatpush1.bf16.msra.mxu0 %v1145
    %1499 = vmatprep.subr.bf16.mxu0 0
    %1500 = vmatpush1.bf16.msra.mxu0 %v1146
    %1501 = vmatprep.mubr.bf16.mxu0 %v215
    %1502 = vmatmul.mubr.bf16.gmra.mrb[0].mxu0 %v214
    %v1503 = vpop.f32.mrb[0].mxu0
    %v1504 = vadd.f32 %v1463, %v1503
    %v1505 = vpop.f32.mrb[0].mxu0
    %v1506 = vpop.f32.mrb[0].mxu0
    %v1507 = vadd.f32 %v1466, %v1506
    %v1508 = vpop.f32.mrb[0].mxu0
    %1509 = vdwg.mxu0
    %1510 = vmatprep.subr.bf16.mxu0 0
    %1511 = vmatpush1.bf16.msra.mxu0 %v1147
    %1512 = vmatprep.subr.bf16.mxu0 0
    %1513 = vmatpush1.bf16.msra.mxu0 %v1148
    %1514 = vmatprep.subr.bf16.mxu0 0
    %1515 = vmatpush1.bf16.msra.mxu0 %v1149
    %1516 = vmatprep.subr.bf16.mxu0 0
    %1517 = vmatpush1.bf16.msra.mxu0 %v1150
    %1518 = vmatprep.subr.bf16.mxu0 0
    %1519 = vmatpush1.bf16.msra.mxu0 %v1151
    %1520 = vmatprep.subr.bf16.mxu0 0
    %1521 = vmatpush1.bf16.msra.mxu0 %v1152
    %1522 = vmatprep.subr.bf16.mxu0 0
    %1523 = vmatpush1.bf16.msra.mxu0 %v1153
    %1524 = vmatprep.subr.bf16.mxu0 0
    %1525 = vmatpush1.bf16.msra.mxu0 %v1154
    %1526 = vmatprep.subr.bf16.mxu0 0
    %1527 = vmatpush1.bf16.msra.mxu0 %v1155
    %1528 = vmatprep.subr.bf16.mxu0 0
    %1529 = vmatpush1.bf16.msra.mxu0 %v1156
    %1530 = vmatprep.subr.bf16.mxu0 0
    %1531 = vmatpush1.bf16.msra.mxu0 %v1157
    %1532 = vmatprep.subr.bf16.mxu0 0
    %1533 = vmatpush1.bf16.msra.mxu0 %v1158
    %1534 = vmatprep.subr.bf16.mxu0 0
    %1535 = vmatpush1.bf16.msra.mxu0 %v1159
    %1536 = vmatprep.subr.bf16.mxu0 0
    %1537 = vmatpush1.bf16.msra.mxu0 %v1160
    %1538 = vmatprep.subr.bf16.mxu0 0
    %1539 = vmatpush1.bf16.msra.mxu0 %v1161
    %1540 = vmatprep.subr.bf16.mxu0 0
    %1541 = vmatpush1.bf16.msra.mxu0 %v1162
    %1542 = vmatprep.mubr.bf16.mxu0 %v217
    %1543 = vmatmul.mubr.bf16.gmra.mrb[0].mxu0 %v216
    %v1544 = vpop.f32.mrb[0].mxu0
    %v1545 = vadd.f32 %v1504, %v1544
    %v1546 = vpop.f32.mrb[0].mxu0
    %v1547 = vpop.f32.mrb[0].mxu0
    %v1548 = vadd.f32 %v1507, %v1547
    %v1549 = vpop.f32.mrb[0].mxu0
    %1550 = vdwg.mxu0
    %1551 = vmatprep.subr.bf16.mxu0 0
    %1552 = vmatpush1.bf16.msra.mxu0 %v1163
    %1553 = vmatprep.subr.bf16.mxu0 0
    %1554 = vmatpush1.bf16.msra.mxu0 %v1164
    %1555 = vmatprep.subr.bf16.mxu0 0
    %1556 = vmatpush1.bf16.msra.mxu0 %v1165
    %1557 = vmatprep.subr.bf16.mxu0 0
    %1558 = vmatpush1.bf16.msra.mxu0 %v1166
    %1559 = vmatprep.subr.bf16.mxu0 0
    %1560 = vmatpush1.bf16.msra.mxu0 %v1167
    %1561 = vmatprep.subr.bf16.mxu0 0
    %1562 = vmatpush1.bf16.msra.mxu0 %v1168
    %1563 = vmatprep.subr.bf16.mxu0 0
    %1564 = vmatpush1.bf16.msra.mxu0 %v1169
    %1565 = vmatprep.subr.bf16.mxu0 0
    %1566 = vmatpush1.bf16.msra.mxu0 %v1170
    %1567 = vmatprep.subr.bf16.mxu0 0
    %1568 = vmatpush1.bf16.msra.mxu0 %v1171
    %1569 = vmatprep.subr.bf16.mxu0 0
    %1570 = vmatpush1.bf16.msra.mxu0 %v1172
    %1571 = vmatprep.subr.bf16.mxu0 0
    %1572 = vmatpush1.bf16.msra.mxu0 %v1173
    %1573 = vmatprep.subr.bf16.mxu0 0
    %1574 = vmatpush1.bf16.msra.mxu0 %v1174
    %1575 = vmatprep.subr.bf16.mxu0 0
    %1576 = vmatpush1.bf16.msra.mxu0 %v1175
    %1577 = vmatprep.subr.bf16.mxu0 0
    %1578 = vmatpush1.bf16.msra.mxu0 %v1176
    %1579 = vmatprep.subr.bf16.mxu0 0
    %1580 = vmatpush1.bf16.msra.mxu0 %v1177
    %1581 = vmatprep.subr.bf16.mxu0 0
    %1582 = vmatpush1.bf16.msra.mxu0 %v1178
    %1583 = vmatprep.mubr.bf16.mxu0 %v219
    %1584 = vmatmul.mubr.bf16.gmra.mrb[0].mxu0 %v218
    %v1585 = vpop.f32.mrb[0].mxu0
    %v1586 = vadd.f32 %v1545, %v1585
    %v1587 = vpop.f32.mrb[0].mxu0
    %v1588 = vpop.f32.mrb[0].mxu0
    %v1589 = vadd.f32 %v1548, %v1588
    %v1590 = vpop.f32.mrb[0].mxu0
    %1591 = vdwg.mxu0
    %1592 = vmatprep.subr.bf16.mxu0 0
    %1593 = vmatpush1.bf16.msra.mxu0 %v1179
    %1594 = vmatprep.subr.bf16.mxu0 0
    %1595 = vmatpush1.bf16.msra.mxu0 %v1180
    %1596 = vmatprep.subr.bf16.mxu0 0
    %1597 = vmatpush1.bf16.msra.mxu0 %v1181
    %1598 = vmatprep.subr.bf16.mxu0 0
    %1599 = vmatpush1.bf16.msra.mxu0 %v1182
    %1600 = vmatprep.subr.bf16.mxu0 0
    %1601 = vmatpush1.bf16.msra.mxu0 %v1183
    %1602 = vmatprep.subr.bf16.mxu0 0
    %1603 = vmatpush1.bf16.msra.mxu0 %v1184
    %1604 = vmatprep.subr.bf16.mxu0 0
    %1605 = vmatpush1.bf16.msra.mxu0 %v1185
    %1606 = vmatprep.subr.bf16.mxu0 0
    %1607 = vmatpush1.bf16.msra.mxu0 %v1186
    %1608 = vmatprep.subr.bf16.mxu0 0
    %1609 = vmatpush1.bf16.msra.mxu0 %v1187
    %1610 = vmatprep.subr.bf16.mxu0 0
    %1611 = vmatpush1.bf16.msra.mxu0 %v1188
    %1612 = vmatprep.subr.bf16.mxu0 0
    %1613 = vmatpush1.bf16.msra.mxu0 %v1189
    %1614 = vmatprep.subr.bf16.mxu0 0
    %1615 = vmatpush1.bf16.msra.mxu0 %v1190
    %1616 = vmatprep.subr.bf16.mxu0 0
    %1617 = vmatpush1.bf16.msra.mxu0 %v1191
    %1618 = vmatprep.subr.bf16.mxu0 0
    %1619 = vmatpush1.bf16.msra.mxu0 %v1192
    %1620 = vmatprep.subr.bf16.mxu0 0
    %1621 = vmatpush1.bf16.msra.mxu0 %v1193
    %1622 = vmatprep.subr.bf16.mxu0 0
    %1623 = vmatpush1.bf16.msra.mxu0 %v1194
    %1624 = vmatprep.mubr.bf16.mxu0 %v221
    %1625 = vmatmul.mubr.bf16.gmra.mrb[0].mxu0 %v220
    %v1626 = vpop.f32.mrb[0].mxu0
    %v1627 = vadd.f32 %v1586, %v1626
    %v1628 = vpop.f32.mrb[0].mxu0
    %v1629 = vpop.f32.mrb[0].mxu0
    %v1630 = vadd.f32 %v1589, %v1629
    %v1631 = vpop.f32.mrb[0].mxu0
    %1632 = vdwg.mxu0
    %1633 = vmatprep.subr.bf16.mxu0 0
    %1634 = vmatpush1.bf16.msra.mxu0 %v1195
    %1635 = vmatprep.subr.bf16.mxu0 0
    %1636 = vmatpush1.bf16.msra.mxu0 %v1196
    %1637 = vmatprep.subr.bf16.mxu0 0
    %1638 = vmatpush1.bf16.msra.mxu0 %v1197
    %1639 = vmatprep.subr.bf16.mxu0 0
    %1640 = vmatpush1.bf16.msra.mxu0 %v1198
    %1641 = vmatprep.subr.bf16.mxu0 0
    %1642 = vmatpush1.bf16.msra.mxu0 %v1199
    %1643 = vmatprep.subr.bf16.mxu0 0
    %1644 = vmatpush1.bf16.msra.mxu0 %v1200
    %1645 = vmatprep.subr.bf16.mxu0 0
    %1646 = vmatpush1.bf16.msra.mxu0 %v1201
    %1647 = vmatprep.subr.bf16.mxu0 0
    %1648 = vmatpush1.bf16.msra.mxu0 %v1202
    %1649 = vmatprep.subr.bf16.mxu0 0
    %1650 = vmatpush1.bf16.msra.mxu0 %v1203
    %1651 = vmatprep.subr.bf16.mxu0 0
    %1652 = vmatpush1.bf16.msra.mxu0 %v1204
    %1653 = vmatprep.subr.bf16.mxu0 0
    %1654 = vmatpush1.bf16.msra.mxu0 %v1205
    %1655 = vmatprep.subr.bf16.mxu0 0
    %1656 = vmatpush1.bf16.msra.mxu0 %v1206
    %1657 = vmatprep.subr.bf16.mxu0 0
    %1658 = vmatpush1.bf16.msra.mxu0 %v1207
    %1659 = vmatprep.subr.bf16.mxu0 0
    %1660 = vmatpush1.bf16.msra.mxu0 %v1208
    %1661 = vmatprep.subr.bf16.mxu0 0
    %1662 = vmatpush1.bf16.msra.mxu0 %v1209
    %1663 = vmatprep.subr.bf16.mxu0 0
    %1664 = vmatpush1.bf16.msra.mxu0 %v1210
    %1665 = vmatprep.mubr.bf16.mxu0 %v223
    %1666 = vmatmul.mubr.bf16.gmra.mrb[0].mxu0 %v222
    %v1667 = vpop.f32.mrb[0].mxu0
    %v1668 = vadd.f32 %v1627, %v1667
    %v1669 = vpop.f32.mrb[0].mxu0
    %v1670 = vpop.f32.mrb[0].mxu0
    %v1671 = vadd.f32 %v1630, %v1670
    %v1672 = vpop.f32.mrb[0].mxu0
    %1673 = vdwg.mxu0
    %1674 = vmatprep.subr.bf16.mxu0 0
    %1675 = vmatpush1.bf16.msra.mxu0 %v1211
    %1676 = vmatprep.subr.bf16.mxu0 0
    %1677 = vmatpush1.bf16.msra.mxu0 %v1212
    %1678 = vmatprep.subr.bf16.mxu0 0
    %1679 = vmatpush1.bf16.msra.mxu0 %v1213
    %1680 = vmatprep.subr.bf16.mxu0 0
    %1681 = vmatpush1.bf16.msra.mxu0 %v1214
    %1682 = vmatprep.subr.bf16.mxu0 0
    %1683 = vmatpush1.bf16.msra.mxu0 %v1215
    %1684 = vmatprep.subr.bf16.mxu0 0
    %1685 = vmatpush1.bf16.msra.mxu0 %v1216
    %1686 = vmatprep.subr.bf16.mxu0 0
    %1687 = vmatpush1.bf16.msra.mxu0 %v1217
    %1688 = vmatprep.subr.bf16.mxu0 0
    %1689 = vmatpush1.bf16.msra.mxu0 %v1218
    %1690 = vmatprep.subr.bf16.mxu0 0
    %1691 = vmatpush1.bf16.msra.mxu0 %v1219
    %1692 = vmatprep.subr.bf16.mxu0 0
    %1693 = vmatpush1.bf16.msra.mxu0 %v1220
    %1694 = vmatprep.subr.bf16.mxu0 0
    %1695 = vmatpush1.bf16.msra.mxu0 %v1221
    %1696 = vmatprep.subr.bf16.mxu0 0
    %1697 = vmatpush1.bf16.msra.mxu0 %v1222
    %1698 = vmatprep.subr.bf16.mxu0 0
    %1699 = vmatpush1.bf16.msra.mxu0 %v1223
    %1700 = vmatprep.subr.bf16.mxu0 0
    %1701 = vmatpush1.bf16.msra.mxu0 %v1224
    %1702 = vmatprep.subr.bf16.mxu0 0
    %1703 = vmatpush1.bf16.msra.mxu0 %v1225
    %1704 = vmatprep.subr.bf16.mxu0 0
    %1705 = vmatpush1.bf16.msra.mxu0 %v1226
    %1706 = vmatprep.mubr.bf16.mxu0 %v225
    %1707 = vmatmul.mubr.bf16.gmra.mrb[0].mxu0 %v224
    %v1708 = vpop.f32.mrb[0].mxu0
    %v1709 = vadd.f32 %v1668, %v1708
    %v1710 = vpop.f32.mrb[0].mxu0
    %v1711 = vpop.f32.mrb[0].mxu0
    %v1712 = vadd.f32 %v1671, %v1711
    %v1713 = vpop.f32.mrb[0].mxu0
    %1714 = vdwg.mxu0
    %1715 = vmatprep.subr.bf16.mxu0 0
    %1716 = vmatpush1.bf16.msra.mxu0 %v1227
    %1717 = vmatprep.subr.bf16.mxu0 0
    %1718 = vmatpush1.bf16.msra.mxu0 %v1228
    %1719 = vmatprep.subr.bf16.mxu0 0
    %1720 = vmatpush1.bf16.msra.mxu0 %v1229
    %1721 = vmatprep.subr.bf16.mxu0 0
    %1722 = vmatpush1.bf16.msra.mxu0 %v1230
    %1723 = vmatprep.subr.bf16.mxu0 0
    %1724 = vmatpush1.bf16.msra.mxu0 %v1231
    %1725 = vmatprep.subr.bf16.mxu0 0
    %1726 = vmatpush1.bf16.msra.mxu0 %v1232
    %1727 = vmatprep.subr.bf16.mxu0 0
    %1728 = vmatpush1.bf16.msra.mxu0 %v1233
    %1729 = vmatprep.subr.bf16.mxu0 0
    %1730 = vmatpush1.bf16.msra.mxu0 %v1234
    %1731 = vmatprep.subr.bf16.mxu0 0
    %1732 = vmatpush1.bf16.msra.mxu0 %v1235
    %1733 = vmatprep.subr.bf16.mxu0 0
    %1734 = vmatpush1.bf16.msra.mxu0 %v1236
    %1735 = vmatprep.subr.bf16.mxu0 0
    %1736 = vmatpush1.bf16.msra.mxu0 %v1237
    %1737 = vmatprep.subr.bf16.mxu0 0
    %1738 = vmatpush1.bf16.msra.mxu0 %v1238
    %1739 = vmatprep.subr.bf16.mxu0 0
    %1740 = vmatpush1.bf16.msra.mxu0 %v1239
    %1741 = vmatprep.subr.bf16.mxu0 0
    %1742 = vmatpush1.bf16.msra.mxu0 %v1240
    %1743 = vmatprep.subr.bf16.mxu0 0
    %1744 = vmatpush1.bf16.msra.mxu0 %v1241
    %1745 = vmatprep.subr.bf16.mxu0 0
    %1746 = vmatpush1.bf16.msra.mxu0 %v1242
    %1747 = vmatprep.mubr.bf16.mxu0 %v227
    %1748 = vmatmul.mubr.bf16.gmra.mrb[0].mxu0 %v226
    %v1749 = vpop.f32.mrb[0].mxu0
    %v1750 = vadd.f32 %v1709, %v1749
    %v1751 = vpop.f32.mrb[0].mxu0
    %v1752 = vpop.f32.mrb[0].mxu0
    %v1753 = vadd.f32 %v1712, %v1752
    %v1754 = vpop.f32.mrb[0].mxu0
    %1755 = vdwg.mxu0
    %v1756 = vmax.f32 %v1750, 0.0
    %v1757 = vmax.f32 %v1753, 0.0
    %v1758 = vpack.c.bf16 %v1757, %v1756
    %v1759 = vld [vmem:[#allocation7] sm:$0xf]
    %v1760 = vld [vmem:[#allocation7 + $0x4] sm:$0xf]
    %v1761 = vld [vmem:[#allocation7 + $0x8] sm:$0xf]
    %v1762 = vld [vmem:[#allocation7 + $0xc] sm:$0xf]
    %v1763 = vld [vmem:[#allocation7 + $0x10] sm:$0xf]
    %v1764 = vld [vmem:[#allocation7 + $0x14] sm:$0xf]
    %v1765 = vld [vmem:[#allocation7 + $0x18] sm:$0xf]
    %v1766 = vld [vmem:[#allocation7 + $0x1c] sm:$0xf]
    %v1767 = vld [vmem:[#allocation7 + $0x20] sm:$0xf]
    %v1768 = vld [vmem:[#allocation7 + $0x24] sm:$0xf]
    %v1769 = vld [vmem:[#allocation7 + $0x28] sm:$0xf]
    %v1770 = vld [vmem:[#allocation7 + $0x2c] sm:$0xf]
    %v1771 = vld [vmem:[#allocation7 + $0x30] sm:$0xf]
    %v1772 = vld [vmem:[#allocation7 + $0x34] sm:$0xf]
    %v1773 = vld [vmem:[#allocation7 + $0x38] sm:$0xf]
    %v1774 = vld [vmem:[#allocation7 + $0x3c] sm:$0xf]
    %v1775 = vld [vmem:[%s4] sm:$0x1]
    %v1777 = vlaneseq
    %v1778 = vshrl.u32 %v1777, 7
    %v1779 = vsub.s32 0, %v1778
    %v1780 = vrot.slane %v1775, %v1779
    %v1798 = vunpack.c.l.b16 %v1759
    %v1799 = vunpack.c.l.b16 %v1760
    %v1800 = vunpack.c.l.b16 %v1761
    %v1801 = vunpack.c.l.b16 %v1762
    %v1802 = vunpack.c.l.b16 %v1763
    %v1803 = vunpack.c.l.b16 %v1764
    %v1804 = vunpack.c.l.b16 %v1765
    %v1805 = vunpack.c.l.b16 %v1766
    %v1806 = vunpack.c.l.b16 %v1767
    %v1807 = vunpack.c.l.b16 %v1768
    %v1808 = vunpack.c.l.b16 %v1769
    %v1809 = vunpack.c.l.b16 %v1770
    %v1810 = vunpack.c.l.b16 %v1771
    %v1811 = vunpack.c.l.b16 %v1772
    %v1812 = vunpack.c.l.b16 %v1773
    %v1813 = vunpack.c.l.b16 %v1774
    %v1814 = vpack.c.b16 %v1799, %v1798
    %v1815 = vpack.c.b16 %v1801, %v1800
    %v1816 = vpack.c.b16 %v1803, %v1802
    %v1817 = vpack.c.b16 %v1805, %v1804
    %v1818 = vpack.c.b16 %v1807, %v1806
    %v1819 = vpack.c.b16 %v1809, %v1808
    %v1820 = vpack.c.b16 %v1811, %v1810
    %v1821 = vpack.c.b16 %v1813, %v1812
    %1830 = vmatprep.subr.bf16.mxu0 0
    %1831 = vmatpush1.bf16.msra.mxu0 %v1814
    %1832 = vmatprep.subr.bf16.mxu0 0
    %1833 = vmatpush1.bf16.msra.mxu0 %v1815
    %1834 = vmatprep.subr.bf16.mxu0 0
    %1835 = vmatpush1.bf16.msra.mxu0 %v1816
    %1836 = vmatprep.subr.bf16.mxu0 0
    %1837 = vmatpush1.bf16.msra.mxu0 %v1817
    %1838 = vmatprep.subr.bf16.mxu0 0
    %1839 = vmatpush1.bf16.msra.mxu0 %v1818
    %1840 = vmatprep.subr.bf16.mxu0 0
    %1841 = vmatpush1.bf16.msra.mxu0 %v1819
    %1842 = vmatprep.subr.bf16.mxu0 0
    %1843 = vmatpush1.bf16.msra.mxu0 %v1820
    %1844 = vmatprep.subr.bf16.mxu0 0
    %1845 = vmatpush1.bf16.msra.mxu0 %v1821
    %1846 = vmatprep.subr.bf16.mxu0 0
    %1847 = vmatpush1.bf16.msra.mxu0 0
    %1848 = vmatprep.subr.bf16.mxu0 0
    %1849 = vmatpush1.bf16.msra.mxu0 0
    %1850 = vmatprep.subr.bf16.mxu0 0
    %1851 = vmatpush1.bf16.msra.mxu0 0
    %1852 = vmatprep.subr.bf16.mxu0 0
    %1853 = vmatpush1.bf16.msra.mxu0 0
    %1854 = vmatprep.subr.bf16.mxu0 0
    %1855 = vmatpush1.bf16.msra.mxu0 0
    %1856 = vmatprep.subr.bf16.mxu0 0
    %1857 = vmatpush1.bf16.msra.mxu0 0
    %1858 = vmatprep.subr.bf16.mxu0 0
    %1859 = vmatpush1.bf16.msra.mxu0 0
    %1860 = vmatprep.subr.bf16.mxu0 0
    %1861 = vmatpush1.bf16.msra.mxu0 0
    %1862 = vmatprep.mubr.bf16.mxu0 0
    %1863 = vmatmul.mubr.bf16.gmra.mrb[0].mxu0 %v1758
    %v1864 = vpop.f32.mrb[0].mxu0
    %v1865 = vadd.f32 %v1780, %v1864
    %v1866 = vpop.f32.mrb[0].mxu0
    %v1867 = vpop.f32.mrb[0].mxu0
    %v1868 = vadd.f32 %v1780, %v1867
    %v1869 = vpop.f32.mrb[0].mxu0
    %1870 = vdwg.mxu0
    %1871 = vst [vmem:[#allocation8] sm:$0xff] %v1865
    %1872 = vst [vmem:[#allocation8 + $0x8] sm:$0xff] %v1868
    %1873 = vmax.xlane.f32.xlu0 %v1865
    %v1874 = vpop.xlane.xlu0 %1873
    %1875 = vmax.xlane.f32.xlu0 %v1868
    %v1876 = vpop.xlane.xlu0 %1875
    %v1877 = vsub.f32 %v1865, %v1874
    %v1878 = vsub.f32 %v1868, %v1876
    %v1879 = vmul.f32 %v1877, 1.442695
    %v1880 = vpow.pop %v1879
    %v1881 = vmul.f32 %v1878, 1.442695
    %v1882 = vpow.pop %v1881
    %1883 = vadd.xlane.f32.xlu0 %v1880
    %v1884 = vpop.xlane.xlu0 %1883
    %1885 = vadd.xlane.f32.xlu0 %v1882
    %v1886 = vpop.xlane.xlu0 %1885
    %v1887 = vrcp.pop %v1884
    %v1888 = vmul.f32 %v1880, %v1887
    %v1889 = vrcp.pop %v1886
    %v1890 = vmul.f32 %v1882, %v1889
    %1891 = vst [vmem:[#allocation9] sm:$0xff] %v1888
    %1892 = vst [vmem:[#allocation9 + $0x8] sm:$0xff] %v1890
    // Predicated region
    $region34: #{tpu_custom_call.1} parent=1 // pred_check
      _
    $region35: #{tpu_custom_call.1} parent=1 // pred_check_branch
      %1894 = sbr.rel (0) target = $region37
    $region36: #{tpu_custom_call.1} parent=1 // pred_region
      %s1896 = ssub.s32 256, 64
      %1897 = vsyncadd [#allocation4], %s1896
      %s1898 = sshll.u32 [#allocation8], 4
      %s1899 = int_to_ptr.vmem [resolvable:$true] %s1898
      %1904 = dma.vmem_to_hbm [thread:$0]  %s1899, 64, %s5, [#allocation4], 64, 64, 4
    $region37: #{tpu_custom_call.1} parent=1 // pred_fallthru
      _
    // Predicated region
    $region38: #{tpu_custom_call.1} parent=1 // pred_check
      _
    $region39: #{tpu_custom_call.1} parent=1 // pred_check_branch
      %1906 = sbr.rel (0) target = $region41
    $region40: #{tpu_custom_call.1} parent=1 // pred_region
      %s1908 = ssub.s32 256, 64
      %1909 = vsyncadd [#allocation10], %s1908
      %s1910 = sshll.u32 [#allocation9], 4
      %s1911 = int_to_ptr.vmem [resolvable:$true] %s1910
      %1916 = dma.vmem_to_hbm [thread:$0]  %s1911, 64, %s6, [#allocation10], 64, 64, 4
    $region41: #{tpu_custom_call.1} parent=1 // pred_fallthru
      _
    // Predicated region
    $region42: #{tpu_custom_call.1} parent=1 // pred_check
      _
    $region43: #{tpu_custom_call.1} parent=1 // pred_check_branch
      %1918 = sbr.rel (0) target = $region45
    $region44: #{tpu_custom_call.1} parent=1 // pred_region
      %1919 = dma.done [#allocation4], 256
    $region45: #{tpu_custom_call.1} parent=1 // pred_fallthru
      _
    // Predicated region
    $region46: #{tpu_custom_call.1} parent=1 // pred_check
      _
    $region47: #{tpu_custom_call.1} parent=1 // pred_check_branch
      %1921 = sbr.rel (0) target = $region49
    $region48: #{tpu_custom_call.1} parent=1 // pred_region
      %1922 = dma.done [#allocation10], 256
    $region49: #{tpu_custom_call.1} parent=1 // pred_fallthru
      _
    %1923 = vsyncpa [#allocation3], 1
    %1924 = vsyncpa [#allocation6], 1
    %1925 = vsyncpa [#allocation4], 1
    %1926 = vsyncpa [#allocation10], 1

</llo_original>
